<compile_context>
chip_gen: v7x
topology: tpu7x:2x2x1
jax: 0.10.0
libtpu: 0.0.40
codegen_flags: <defaults>
</compile_context>

<pallas_src>
import functools

import numpy as np
import jax
import jax.numpy as jnp
from jax.experimental import pallas as pl
from jax.experimental.pallas import tpu as pltpu


def _cdiv(a, b):
    return -(-a // b)


# -----------------------------------------------------------------------------
# Pallas kernel: leaf module + level-wise binary-tree composition (batched).
# Transposed layout: values are (features, node*BB + tree) = (sublanes, lanes).
# -----------------------------------------------------------------------------
def _tree_encoder_kernel(x_ref, wcx_ref, bc_ref, wl_ref, wr_ref, bg_ref,
                         leaf_ref, root_ref, *, L, H, BB, mm_dtype):
    # Hoisted weight / bias loads (the level loop below unrolls at trace time).
    wcx = wcx_ref[...]          # (2H, D)  rows = [Wcx ; Wox], matmul dtype
    bc = bc_ref[...]            # (2H, 1)  f32
    wl = wl_ref[...]            # (4H, H)  rows = [Wilh; Wlflh; Wrflh; Wulh]
    wr = wr_ref[...]            # (4H, H)  rows = [Wirh; Wlfrh; Wrfrh; Wurh]
    bg = bg_ref[...]            # (4H, 1)  f32 (pre-summed left+right biases)

    # ---- BinaryTreeLeafModule on all L*BB leaves at once:
    #      c = cx(x); o = sigmoid(ox(x)); h = o * tanh(c)
    x = x_ref[0]                                                     # (D, L*BB)
    pre = jnp.dot(wcx, x, preferred_element_type=jnp.float32) + bc   # (2H, L*BB)
    c = pre[:H, :]
    o = jax.nn.sigmoid(pre[H:, :])
    h = o * jnp.tanh(c)

    # Leaf hidden states: lane-dense store (last dim L*BB >= 128 for BB >= 16).
    leaf_ref[0, :, :] = h

    # ---- BinaryTreeComposer, level by level (L static -> loop unrolls).
    # Columns are node-outer / tree-inner in bit-reversed node order, so the
    # sibling of column j in the left half is column j + m*BB: contiguous
    # lane half-slices, no strided gathers.
    n = L
    while n > 1:
        m = n // 2
        lc, rc = c[:, :m * BB], c[:, m * BB:n * BB]
        lh, rh = h[:, :m * BB], h[:, m * BB:n * BB]
        gates = (jnp.dot(wl, lh.astype(mm_dtype),
                         preferred_element_type=jnp.float32)
                 + jnp.dot(wr, rh.astype(mm_dtype),
                           preferred_element_type=jnp.float32)
                 + bg)                                          # (4H, m*BB) f32
        sg = jax.nn.sigmoid(gates[:3 * H, :])   # one EUP call for i, lf, rf
        u_g = jnp.tanh(gates[3 * H:, :])        # one EUP call for update
        i_g = sg[:H, :]
        lf_g = sg[H:2 * H, :]
        rf_g = sg[2 * H:3 * H, :]
        c = i_g * u_g + lf_g * lc + rf_g * rc   # f32 elementwise (v5e-safe)
        h = jnp.tanh(c)                         # gate_output=False path
        n = m

    # Root state: (H, BB) each; tiny block, stored alongside the leaf output.
    root_ref[0, :H, :] = c
    root_ref[0, H:, :] = h


# -----------------------------------------------------------------------------
# pallas_call wrapper
# -----------------------------------------------------------------------------
def tree_encoder_pallas(xT, wcx, bc, wl, wr, bg, *, L, BB):
    """xT: (G, D, L*BB) leaves in transposed node-outer/tree-inner layout.

    Returns (leaf_h (G, H, L*BB) f32, root (G, 2H, BB) f32 with rows [c; h])."""
    G, D, M = xT.shape
    H = wcx.shape[0] // 2
    assert M == L * BB

    kernel = functools.partial(_tree_encoder_kernel, L=L, H=H, BB=BB,
                               mm_dtype=xT.dtype)
    return pl.pallas_call(
        kernel,
        out_shape=(jax.ShapeDtypeStruct((G, H, M), jnp.float32),
                   jax.ShapeDtypeStruct((G, 2 * H, BB), jnp.float32)),
        grid=(G,),
        in_specs=[
            pl.BlockSpec((1, D, M), lambda g: (g, 0, 0)),
            pl.BlockSpec(wcx.shape, lambda g: (0, 0)),   # constant index_map:
            pl.BlockSpec(bc.shape, lambda g: (0, 0)),    # weights fetched once
            pl.BlockSpec(wl.shape, lambda g: (0, 0)),
            pl.BlockSpec(wr.shape, lambda g: (0, 0)),
            pl.BlockSpec(bg.shape, lambda g: (0, 0)),
        ],
        out_specs=(
            pl.BlockSpec((1, H, M), lambda g: (g, 0, 0)),
            pl.BlockSpec((1, 2 * H, BB), lambda g: (g, 0, 0)),
        ),
        compiler_params=pltpu.CompilerParams(
            dimension_semantics=("parallel",)),
    )(xT, wcx, bc, wl, wr, bg)


# -----------------------------------------------------------------------------
# Host-side helpers
# -----------------------------------------------------------------------------
def _bit_reverse_perm(L):
    bits = max(L.bit_length() - 1, 0)
    perm = np.zeros(L, dtype=np.int32)
    for i in range(L):
        r, v = 0, i
        for _ in range(bits):
            r = (r << 1) | (v & 1)
            v >>= 1
        perm[i] = r
    return perm


def _choose_blocking(B, L, block_b=None, target_bb=256):
    """Pick (BB, G, B_pad).  BB*L is kept a multiple of 128 (lane-dense I/O),
    B is padded up to G*BB, and G >= 2 is preferred so v7x megacore has work."""
    lane_mult = max(8, _cdiv(128, L))
    if block_b is None:
        G = _cdiv(B, target_bb)
        if B >= 2 * lane_mult:
            G = max(G, 2)
        BB = _cdiv(_cdiv(B, G), lane_mult) * lane_mult
    else:
        BB = int(block_b)
    G = _cdiv(B, BB)
    return BB, G, G * BB


# -----------------------------------------------------------------------------
# TreeEncoder.forward wrapper (embedding lookup, layout plumbing, padding)
# -----------------------------------------------------------------------------
def tree_encoder_forward(token_ids, lengths, params, *, block_b=None,
                         matmul_dtype=jnp.bfloat16):
    token_ids = jnp.asarray(token_ids)
    if token_ids.ndim == 1:
        token_ids = token_ids[None, :]
    B, L = token_ids.shape
    if L <= 0 or (L & (L - 1)) != 0:
        raise ValueError("TreeEncoder Pallas kernel requires a power-of-two "
                         "leaf count (complete binary tree).")
    emb = params["emb"]
    H = params["wcx_cat"].shape[0] // 2

    BB, G, B_pad = _choose_blocking(B, L, block_b)
    perm = _bit_reverse_perm(L)

    # Fold the bit-reverse permutation and the node-outer/tree-inner layout
    # into the int32 token array (no f32 permute copy), then embed and do a
    # single cast+transpose to the lane-dense (G, D, L*BB) kernel operand.
    tok = token_ids[:, perm]
    if B_pad > B:
        tok = jnp.concatenate(
            [tok, jnp.zeros((B_pad - B, L), tok.dtype)], axis=0)     # PAD trees
    tok = tok.reshape(G, BB, L).transpose(0, 2, 1).reshape(G, L * BB)
    x = emb[tok].astype(matmul_dtype)                                # (G, L*BB, D)
    xT = jnp.transpose(x, (0, 2, 1))                                 # (G, D, L*BB)

    wcx = params["wcx_cat"].astype(matmul_dtype)
    wl = params["wl_cat"].astype(matmul_dtype)
    wr = params["wr_cat"].astype(matmul_dtype)
    leaf, root = tree_encoder_pallas(
        xT, wcx, params["bc_col"], wl, wr, params["bg_col"], L=L, BB=BB)

    # Un-scramble: columns are l*BB + b; bit-reversal is an involution.
    leaf_h = (leaf.reshape(G, H, L, BB).transpose(0, 3, 2, 1)
              .reshape(B_pad, L, H)[:B][:, perm, :])                 # (B, L, H)
    root_c = root[:, :H, :].transpose(0, 2, 1).reshape(B_pad, H)[:B]
    root_h = root[:, H:, :].transpose(0, 2, 1).reshape(B_pad, H)[:B]

    max_length = int(np.max(lengths))
    output = leaf_h[:, :, None, :]                                   # (B, L, 1, H)
    supl = max_length - L
    if supl > 0:
        output = jnp.concatenate(
            [output, jnp.zeros((B, supl, 1, H), output.dtype)], axis=1)
    state = (root_c[:, None, None, :], root_h[:, None, None, :])     # (B,1,1,H)
    return output, state


# -----------------------------------------------------------------------------
# Deterministic parameter init (shapes per module __init__)
# -----------------------------------------------------------------------------
def init_params(key, vocab, D, H, pad_idx=0):
    keys = jax.random.split(key, 21)
    ki = iter(range(21))

    def lin(in_dim, out_dim):
        w = jax.random.normal(keys[next(ki)], (out_dim, in_dim), jnp.float32) * 0.1
        b = jax.random.normal(keys[next(ki)], (out_dim,), jnp.float32) * 0.1
        return w, b

    emb = jax.random.normal(keys[next(ki)], (vocab, D), jnp.float32)
    emb = emb.at[pad_idx].set(0.0)                        # padding_idx=PAD

    # leaf module
    Wcx, bcx = lin(D, H)
    Wox, box = lin(D, H)
    # composer gates (each gate = two Linears, mem_dim -> mem_dim)
    Wilh, bilh = lin(H, H); Wirh, birh = lin(H, H)
    Wlflh, blflh = lin(H, H); Wlfrh, blfrh = lin(H, H)
    Wrflh, brflh = lin(H, H); Wrfrh, brfrh = lin(H, H)
    Wulh, bulh = lin(H, H); Wurh, burh = lin(H, H)

    params = dict(
        emb=emb,
        # kernel-side packed weights (transposed layout: W @ x^T)
        wcx_cat=jnp.concatenate([Wcx, Wox], axis=0),                   # (2H, D)
        bc_col=jnp.concatenate([bcx, box])[:, None],                   # (2H, 1)
        wl_cat=jnp.concatenate([Wilh, Wlflh, Wrflh, Wulh], axis=0),    # (4H, H)
        wr_cat=jnp.concatenate([Wirh, Wlfrh, Wrfrh, Wurh], axis=0),    # (4H, H)
        # NOTE: biases pre-summed (bilh+birh, ...) — valid because both side
        # Linears always feed the same pre-activation sum.
        bg_col=jnp.concatenate(
            [bilh + birh, blflh + blfrh, brflh + brfrh, bulh + burh])[:, None],
        # raw weights for the pure-JAX reference
        raw=dict(Wcx=Wcx, bcx=bcx, Wox=Wox, box=box,
                 Wilh=Wilh, bilh=bilh, Wirh=Wirh, birh=birh,
                 Wlflh=Wlflh, blflh=blflh, Wlfrh=Wlfrh, blfrh=blfrh,
                 Wrflh=Wrflh, brflh=brflh, Wrfrh=Wrfrh, brfrh=brfrh,
                 Wulh=Wulh, bulh=bulh, Wurh=Wurh, burh=burh),
    )
    return params


# -----------------------------------------------------------------------------
# Pure-JAX reference (mirrors the PyTorch recursion over a complete tree)
# -----------------------------------------------------------------------------
def ref_forward(token_ids, lengths, params):
    p = params["raw"]
    emb = params["emb"]

    def linear(x, w, b):
        return x @ w.T + b

    def leaf(x):
        c = linear(x, p["Wcx"], p["bcx"])
        o = jax.nn.sigmoid(linear(x, p["Wox"], p["box"]))
        h = o * jnp.tanh(c)
        return h, (c, h)

    def compose(lc, lh, rc, rh):
        i = jax.nn.sigmoid(linear(lh, p["Wilh"], p["bilh"]) + linear(rh, p["Wirh"], p["birh"]))
        lf = jax.nn.sigmoid(linear(lh, p["Wlflh"], p["blflh"]) + linear(rh, p["Wlfrh"], p["blfrh"]))
        rf = jax.nn.sigmoid(linear(lh, p["Wrflh"], p["brflh"]) + linear(rh, p["Wrfrh"], p["brfrh"]))
        u = jnp.tanh(linear(lh, p["Wulh"], p["bulh"]) + linear(rh, p["Wurh"], p["burh"]))
        c = i * u + lf * lc + rf * rc
        h = jnp.tanh(c)
        return c, h

    def encode(lo, hi):        # complete binary tree over leaves [lo, hi)
        if hi - lo == 1:
            x = emb[token_ids[lo]][None, :]
            return leaf(x)
        mid = (lo + hi) // 2
        lout, (lc, lh) = encode(lo, mid)
        rout, (rc, rh) = encode(mid, hi)
        c, h = compose(lc, lh, rc, rh)
        return jnp.concatenate([lout, rout], axis=0), (c, h)

    out, (c, h) = encode(0, token_ids.shape[0])
    max_length = int(np.max(lengths))
    out = out[:, None, :]
    supl = max_length - out.shape[0]
    if supl > 0:
        out = jnp.concatenate(
            [out, jnp.zeros((supl, 1, out.shape[2]), out.dtype)], axis=0)
    return out, (c[:, None, :], h[:, None, :])


# -----------------------------------------------------------------------------
if __name__ == "__main__":
    VOCAB, D, H, L, B = 20, 32, 32, 8, 14     # word_vec_size=32, hidden=32, 8 leaves
    key = jax.random.PRNGKey(0)
    k_params, k_tok = jax.random.split(key)

    params = init_params(k_params, VOCAB, D, H)
    token_ids = jax.random.randint(k_tok, (B, L), 1, VOCAB)   # avoid PAD=0
    lengths = np.array([10, 7, 8, 9, 10, 8, 8, 8, 9, 10, 7, 8, 8, 9],
                       dtype=np.int64)                        # max_length=10 > L
    max_length = int(np.max(lengths))

    # 1) Exact-math path: f32 matmul operands, explicit BB=8 -> G=2 grid
    #    (exercises multi-block grid + batch padding).
    out32, (c32, h32) = tree_encoder_forward(
        token_ids, lengths, params, block_b=8, matmul_dtype=jnp.float32)
    # 2) Fast path: bf16 matmul operands, default lane-dense blocking (BB=16).
    outbf, (cbf, hbf) = tree_encoder_forward(token_ids, lengths, params)
    jax.block_until_ready((out32, c32, h32, outbf, cbf, hbf))

    for b in range(B):
        ref_out, (ref_c, ref_h) = ref_forward(token_ids[b], lengths, params)
        np.testing.assert_allclose(np.asarray(out32[b]), np.asarray(ref_out),
                                   rtol=1e-4, atol=1e-4)
        np.testing.assert_allclose(np.asarray(c32[b]), np.asarray(ref_c),
                                   rtol=1e-4, atol=1e-4)
        np.testing.assert_allclose(np.asarray(h32[b]), np.asarray(ref_h),
                                   rtol=1e-4, atol=1e-4)
        np.testing.assert_allclose(np.asarray(outbf[b]), np.asarray(ref_out),
                                   rtol=5e-2, atol=5e-2)
        np.testing.assert_allclose(np.asarray(cbf[b]), np.asarray(ref_c),
                                   rtol=5e-2, atol=5e-2)
        np.testing.assert_allclose(np.asarray(hbf[b]), np.asarray(ref_h),
                                   rtol=5e-2, atol=5e-2)

    assert out32.shape == (B, max_length, 1, H) and outbf.shape == out32.shape
    assert c32.shape == (B, 1, 1, H) and h32.shape == (B, 1, 1, H)
    print("KERNEL_OK")
</pallas_src>

<mosaic_0001>
module attributes {stable_mosaic.version = 11 : i64} {
  func.func @_tree_encoder_kernel(%arg0: i32, %arg1: memref<1x32x64xf32, #tpu.memory_space<vmem>>, %arg2: memref<64x32xf32, #tpu.memory_space<vmem>>, %arg3: memref<64x1xf32, #tpu.memory_space<vmem>>, %arg4: memref<128x32xf32, #tpu.memory_space<vmem>>, %arg5: memref<128x32xf32, #tpu.memory_space<vmem>>, %arg6: memref<128x1xf32, #tpu.memory_space<vmem>>, %arg7: memref<1x32x64xf32, #tpu.memory_space<vmem>>, %arg8: memref<1x64x8xf32, #tpu.memory_space<vmem>>) attributes {dimension_semantics = [#tpu.dimension_semantics<parallel>], iteration_bounds = array<i64: 2>, scalar_prefetch = 0 : i64, scratch_operands = 0 : i64, tpu.core_type = #tpu.core_type<tc>, window_params = [{transform_indices = @transform_0, window_bounds = array<i64: 1, 32, 64>}, {pipeline_mode = #tpu.pipeline_mode<synchronous>, transform_indices = @transform_1, window_bounds = array<i64: 64, 32>}, {pipeline_mode = #tpu.pipeline_mode<synchronous>, transform_indices = @transform_2, window_bounds = array<i64: 64, 1>}, {pipeline_mode = #tpu.pipeline_mode<synchronous>, transform_indices = @transform_3, window_bounds = array<i64: 128, 32>}, {pipeline_mode = #tpu.pipeline_mode<synchronous>, transform_indices = @transform_4, window_bounds = array<i64: 128, 32>}, {pipeline_mode = #tpu.pipeline_mode<synchronous>, transform_indices = @transform_5, window_bounds = array<i64: 128, 1>}, {transform_indices = @transform_6, window_bounds = array<i64: 1, 32, 64>}, {transform_indices = @transform_7, window_bounds = array<i64: 1, 64, 8>}]} {
    %c0 = arith.constant 0 : index
    %c0_0 = arith.constant 0 : index
    %0 = vector.load %arg2[%c0, %c0_0] : memref<64x32xf32, #tpu.memory_space<vmem>>, vector<64x32xf32>
    %c0_1 = arith.constant 0 : index
    %c0_2 = arith.constant 0 : index
    %1 = vector.load %arg3[%c0_1, %c0_2] : memref<64x1xf32, #tpu.memory_space<vmem>>, vector<64x1xf32>
    %c0_3 = arith.constant 0 : index
    %c0_4 = arith.constant 0 : index
    %2 = vector.load %arg4[%c0_3, %c0_4] : memref<128x32xf32, #tpu.memory_space<vmem>>, vector<128x32xf32>
    %c0_5 = arith.constant 0 : index
    %c0_6 = arith.constant 0 : index
    %3 = vector.load %arg5[%c0_5, %c0_6] : memref<128x32xf32, #tpu.memory_space<vmem>>, vector<128x32xf32>
    %c0_7 = arith.constant 0 : index
    %c0_8 = arith.constant 0 : index
    %4 = vector.load %arg6[%c0_7, %c0_8] : memref<128x1xf32, #tpu.memory_space<vmem>>, vector<128x1xf32>
    %c0_9 = arith.constant 0 : index
    %c0_10 = arith.constant 0 : index
    %c0_11 = arith.constant 0 : index
    %5 = vector.load %arg1[%c0_9, %c0_10, %c0_11] : memref<1x32x64xf32, #tpu.memory_space<vmem>>, vector<1x32x64xf32>
    %6 = vector.shape_cast %5 : vector<1x32x64xf32> to vector<32x64xf32>
    %cst = arith.constant dense<0.000000e+00> : vector<64x64xf32>
    %7 = tpu.matmul %0, %6, %cst {dimension_numbers = #tpu.dot_dimension_numbers<[1], [0], [0], [1], [0, 0, 1, 1], [], []>} : vector<64x32xf32>, vector<32x64xf32>, vector<64x64xf32> -> vector<64x64xf32>
    %8 = vector.broadcast %1 : vector<64x1xf32> to vector<64x64xf32>
    %9 = arith.addf %7, %8 : vector<64x64xf32>
    %10 = vector.extract_strided_slice %9 {offsets = [0, 0], sizes = [32, 64], strides = [1, 1]} : vector<64x64xf32> to vector<32x64xf32>
    %11 = vector.extract_strided_slice %9 {offsets = [32, 0], sizes = [32, 64], strides = [1, 1]} : vector<64x64xf32> to vector<32x64xf32>
    %12 = arith.negf %11 : vector<32x64xf32>
    %13 = math.exp %12 : vector<32x64xf32>
    %cst_12 = arith.constant 1.000000e+00 : f32
    %14 = vector.broadcast %cst_12 : f32 to vector<32x64xf32>
    %15 = arith.addf %14, %13 : vector<32x64xf32>
    %16 = arith.divf %14, %15 : vector<32x64xf32>
    %17 = math.tanh %10 : vector<32x64xf32>
    %18 = arith.mulf %16, %17 : vector<32x64xf32>
    %c0_13 = arith.constant 0 : index
    %c0_14 = arith.constant 0 : index
    %c0_15 = arith.constant 0 : index
    %19 = vector.load %arg7[%c0_13, %c0_14, %c0_15] : memref<1x32x64xf32, #tpu.memory_space<vmem>>, vector<1x32x64xf32>
    %20 = vector.shape_cast %19 : vector<1x32x64xf32> to vector<32x64xf32>
    %21 = vector.shape_cast %18 : vector<32x64xf32> to vector<1x32x64xf32>
    tpu.vector_store %arg7[%c0_13, %c0_14, %c0_15], %21 {strides = array<i32>} : memref<1x32x64xf32, #tpu.memory_space<vmem>>, vector<1x32x64xf32>,
    %22 = vector.extract_strided_slice %10 {offsets = [0, 0], sizes = [32, 32], strides = [1, 1]} : vector<32x64xf32> to vector<32x32xf32>
    %23 = vector.extract_strided_slice %10 {offsets = [0, 32], sizes = [32, 32], strides = [1, 1]} : vector<32x64xf32> to vector<32x32xf32>
    %24 = vector.extract_strided_slice %18 {offsets = [0, 0], sizes = [32, 32], strides = [1, 1]} : vector<32x64xf32> to vector<32x32xf32>
    %25 = vector.extract_strided_slice %18 {offsets = [0, 32], sizes = [32, 32], strides = [1, 1]} : vector<32x64xf32> to vector<32x32xf32>
    %cst_16 = arith.constant dense<0.000000e+00> : vector<128x32xf32>
    %26 = tpu.matmul %2, %24, %cst_16 {dimension_numbers = #tpu.dot_dimension_numbers<[1], [0], [0], [1], [0, 0, 1, 1], [], []>} : vector<128x32xf32>, vector<32x32xf32>, vector<128x32xf32> -> vector<128x32xf32>
    %cst_17 = arith.constant dense<0.000000e+00> : vector<128x32xf32>
    %27 = tpu.matmul %3, %25, %cst_17 {dimension_numbers = #tpu.dot_dimension_numbers<[1], [0], [0], [1], [0, 0, 1, 1], [], []>} : vector<128x32xf32>, vector<32x32xf32>, vector<128x32xf32> -> vector<128x32xf32>
    %28 = arith.addf %26, %27 : vector<128x32xf32>
    %29 = vector.broadcast %4 : vector<128x1xf32> to vector<128x32xf32>
    %30 = arith.addf %28, %29 : vector<128x32xf32>
    %31 = vector.extract_strided_slice %30 {offsets = [0, 0], sizes = [96, 32], strides = [1, 1]} : vector<128x32xf32> to vector<96x32xf32>
    %32 = arith.negf %31 : vector<96x32xf32>
    %33 = math.exp %32 : vector<96x32xf32>
    %cst_18 = arith.constant 1.000000e+00 : f32
    %34 = vector.broadcast %cst_18 : f32 to vector<96x32xf32>
    %35 = arith.addf %34, %33 : vector<96x32xf32>
    %36 = arith.divf %34, %35 : vector<96x32xf32>
    %37 = vector.extract_strided_slice %30 {offsets = [96, 0], sizes = [32, 32], strides = [1, 1]} : vector<128x32xf32> to vector<32x32xf32>
    %38 = math.tanh %37 : vector<32x32xf32>
    %39 = vector.extract_strided_slice %36 {offsets = [0, 0], sizes = [32, 32], strides = [1, 1]} : vector<96x32xf32> to vector<32x32xf32>
    %40 = vector.extract_strided_slice %36 {offsets = [32, 0], sizes = [32, 32], strides = [1, 1]} : vector<96x32xf32> to vector<32x32xf32>
    %41 = vector.extract_strided_slice %36 {offsets = [64, 0], sizes = [32, 32], strides = [1, 1]} : vector<96x32xf32> to vector<32x32xf32>
    %42 = arith.mulf %39, %38 : vector<32x32xf32>
    %43 = arith.mulf %40, %22 : vector<32x32xf32>
    %44 = arith.addf %42, %43 : vector<32x32xf32>
    %45 = arith.mulf %41, %23 : vector<32x32xf32>
    %46 = arith.addf %44, %45 : vector<32x32xf32>
    %47 = math.tanh %46 : vector<32x32xf32>
    %48 = vector.extract_strided_slice %46 {offsets = [0, 0], sizes = [32, 16], strides = [1, 1]} : vector<32x32xf32> to vector<32x16xf32>
    %49 = vector.extract_strided_slice %46 {offsets = [0, 16], sizes = [32, 16], strides = [1, 1]} : vector<32x32xf32> to vector<32x16xf32>
    %50 = vector.extract_strided_slice %47 {offsets = [0, 0], sizes = [32, 16], strides = [1, 1]} : vector<32x32xf32> to vector<32x16xf32>
    %51 = vector.extract_strided_slice %47 {offsets = [0, 16], sizes = [32, 16], strides = [1, 1]} : vector<32x32xf32> to vector<32x16xf32>
    %cst_19 = arith.constant dense<0.000000e+00> : vector<128x16xf32>
    %52 = tpu.matmul %2, %50, %cst_19 {dimension_numbers = #tpu.dot_dimension_numbers<[1], [0], [0], [1], [0, 0, 1, 1], [], []>} : vector<128x32xf32>, vector<32x16xf32>, vector<128x16xf32> -> vector<128x16xf32>
    %cst_20 = arith.constant dense<0.000000e+00> : vector<128x16xf32>
    %53 = tpu.matmul %3, %51, %cst_20 {dimension_numbers = #tpu.dot_dimension_numbers<[1], [0], [0], [1], [0, 0, 1, 1], [], []>} : vector<128x32xf32>, vector<32x16xf32>, vector<128x16xf32> -> vector<128x16xf32>
    %54 = arith.addf %52, %53 : vector<128x16xf32>
    %55 = vector.broadcast %4 : vector<128x1xf32> to vector<128x16xf32>
    %56 = arith.addf %54, %55 : vector<128x16xf32>
    %57 = vector.extract_strided_slice %56 {offsets = [0, 0], sizes = [96, 16], strides = [1, 1]} : vector<128x16xf32> to vector<96x16xf32>
    %58 = arith.negf %57 : vector<96x16xf32>
    %59 = math.exp %58 : vector<96x16xf32>
    %cst_21 = arith.constant 1.000000e+00 : f32
    %60 = vector.broadcast %cst_21 : f32 to vector<96x16xf32>
    %61 = arith.addf %60, %59 : vector<96x16xf32>
    %62 = arith.divf %60, %61 : vector<96x16xf32>
    %63 = vector.extract_strided_slice %56 {offsets = [96, 0], sizes = [32, 16], strides = [1, 1]} : vector<128x16xf32> to vector<32x16xf32>
    %64 = math.tanh %63 : vector<32x16xf32>
    %65 = vector.extract_strided_slice %62 {offsets = [0, 0], sizes = [32, 16], strides = [1, 1]} : vector<96x16xf32> to vector<32x16xf32>
    %66 = vector.extract_strided_slice %62 {offsets = [32, 0], sizes = [32, 16], strides = [1, 1]} : vector<96x16xf32> to vector<32x16xf32>
    %67 = vector.extract_strided_slice %62 {offsets = [64, 0], sizes = [32, 16], strides = [1, 1]} : vector<96x16xf32> to vector<32x16xf32>
    %68 = arith.mulf %65, %64 : vector<32x16xf32>
    %69 = arith.mulf %66, %48 : vector<32x16xf32>
    %70 = arith.addf %68, %69 : vector<32x16xf32>
    %71 = arith.mulf %67, %49 : vector<32x16xf32>
    %72 = arith.addf %70, %71 : vector<32x16xf32>
    %73 = math.tanh %72 : vector<32x16xf32>
    %74 = vector.extract_strided_slice %72 {offsets = [0, 0], sizes = [32, 8], strides = [1, 1]} : vector<32x16xf32> to vector<32x8xf32>
    %75 = vector.extract_strided_slice %72 {offsets = [0, 8], sizes = [32, 8], strides = [1, 1]} : vector<32x16xf32> to vector<32x8xf32>
    %76 = vector.extract_strided_slice %73 {offsets = [0, 0], sizes = [32, 8], strides = [1, 1]} : vector<32x16xf32> to vector<32x8xf32>
    %77 = vector.extract_strided_slice %73 {offsets = [0, 8], sizes = [32, 8], strides = [1, 1]} : vector<32x16xf32> to vector<32x8xf32>
    %cst_22 = arith.constant dense<0.000000e+00> : vector<128x8xf32>
    %78 = tpu.matmul %2, %76, %cst_22 {dimension_numbers = #tpu.dot_dimension_numbers<[1], [0], [0], [1], [0, 0, 1, 1], [], []>} : vector<128x32xf32>, vector<32x8xf32>, vector<128x8xf32> -> vector<128x8xf32>
    %cst_23 = arith.constant dense<0.000000e+00> : vector<128x8xf32>
    %79 = tpu.matmul %3, %77, %cst_23 {dimension_numbers = #tpu.dot_dimension_numbers<[1], [0], [0], [1], [0, 0, 1, 1], [], []>} : vector<128x32xf32>, vector<32x8xf32>, vector<128x8xf32> -> vector<128x8xf32>
    %80 = arith.addf %78, %79 : vector<128x8xf32>
    %81 = vector.broadcast %4 : vector<128x1xf32> to vector<128x8xf32>
    %82 = arith.addf %80, %81 : vector<128x8xf32>
    %83 = vector.extract_strided_slice %82 {offsets = [0, 0], sizes = [96, 8], strides = [1, 1]} : vector<128x8xf32> to vector<96x8xf32>
    %84 = arith.negf %83 : vector<96x8xf32>
    %85 = math.exp %84 : vector<96x8xf32>
    %cst_24 = arith.constant 1.000000e+00 : f32
    %86 = vector.broadcast %cst_24 : f32 to vector<96x8xf32>
    %87 = arith.addf %86, %85 : vector<96x8xf32>
    %88 = arith.divf %86, %87 : vector<96x8xf32>
    %89 = vector.extract_strided_slice %82 {offsets = [96, 0], sizes = [32, 8], strides = [1, 1]} : vector<128x8xf32> to vector<32x8xf32>
    %90 = math.tanh %89 : vector<32x8xf32>
    %91 = vector.extract_strided_slice %88 {offsets = [0, 0], sizes = [32, 8], strides = [1, 1]} : vector<96x8xf32> to vector<32x8xf32>
    %92 = vector.extract_strided_slice %88 {offsets = [32, 0], sizes = [32, 8], strides = [1, 1]} : vector<96x8xf32> to vector<32x8xf32>
    %93 = vector.extract_strided_slice %88 {offsets = [64, 0], sizes = [32, 8], strides = [1, 1]} : vector<96x8xf32> to vector<32x8xf32>
    %94 = arith.mulf %91, %90 : vector<32x8xf32>
    %95 = arith.mulf %92, %74 : vector<32x8xf32>
    %96 = arith.addf %94, %95 : vector<32x8xf32>
    %97 = arith.mulf %93, %75 : vector<32x8xf32>
    %98 = arith.addf %96, %97 : vector<32x8xf32>
    %99 = math.tanh %98 : vector<32x8xf32>
    %c0_25 = arith.constant 0 : index
    %c0_26 = arith.constant 0 : index
    %c0_27 = arith.constant 0 : index
    %100 = vector.load %arg8[%c0_25, %c0_26, %c0_27] : memref<1x64x8xf32, #tpu.memory_space<vmem>>, vector<1x32x8xf32>
    %101 = vector.shape_cast %100 : vector<1x32x8xf32> to vector<32x8xf32>
    %102 = vector.shape_cast %98 : vector<32x8xf32> to vector<1x32x8xf32>
    tpu.vector_store %arg8[%c0_25, %c0_26, %c0_27], %102 {strides = array<i32>} : memref<1x64x8xf32, #tpu.memory_space<vmem>>, vector<1x32x8xf32>,
    %c0_28 = arith.constant 0 : index
    %c32 = arith.constant 32 : index
    %c0_29 = arith.constant 0 : index
    %103 = vector.load %arg8[%c0_28, %c32, %c0_29] : memref<1x64x8xf32, #tpu.memory_space<vmem>>, vector<1x32x8xf32>
    %104 = vector.shape_cast %103 : vector<1x32x8xf32> to vector<32x8xf32>
    %105 = vector.shape_cast %99 : vector<32x8xf32> to vector<1x32x8xf32>
    tpu.vector_store %arg8[%c0_28, %c32, %c0_29], %105 {strides = array<i32>} : memref<1x64x8xf32, #tpu.memory_space<vmem>>, vector<1x32x8xf32>,
    return
  }
  func.func @transform_0(%arg0: i32) -> (i32, i32, i32) {
    %c0_i32 = arith.constant 0 : i32
    %c0_i32_0 = arith.constant 0 : i32
    %c0_i32_1 = arith.constant 0 : i32
    return %arg0, %c0_i32, %c0_i32_0 : i32, i32, i32
  }
  func.func @transform_1(%arg0: i32) -> (i32, i32) {
    %c0_i32 = arith.constant 0 : i32
    %c0_i32_0 = arith.constant 0 : i32
    %c0_i32_1 = arith.constant 0 : i32
    return %c0_i32, %c0_i32_0 : i32, i32
  }
  func.func @transform_2(%arg0: i32) -> (i32, i32) {
    %c0_i32 = arith.constant 0 : i32
    %c0_i32_0 = arith.constant 0 : i32
    %c0_i32_1 = arith.constant 0 : i32
    return %c0_i32, %c0_i32_0 : i32, i32
  }
  func.func @transform_3(%arg0: i32) -> (i32, i32) {
    %c0_i32 = arith.constant 0 : i32
    %c0_i32_0 = arith.constant 0 : i32
    %c0_i32_1 = arith.constant 0 : i32
    return %c0_i32, %c0_i32_0 : i32, i32
  }
  func.func @transform_4(%arg0: i32) -> (i32, i32) {
    %c0_i32 = arith.constant 0 : i32
    %c0_i32_0 = arith.constant 0 : i32
    %c0_i32_1 = arith.constant 0 : i32
    return %c0_i32, %c0_i32_0 : i32, i32
  }
  func.func @transform_5(%arg0: i32) -> (i32, i32) {
    %c0_i32 = arith.constant 0 : i32
    %c0_i32_0 = arith.constant 0 : i32
    %c0_i32_1 = arith.constant 0 : i32
    return %c0_i32, %c0_i32_0 : i32, i32
  }
  func.func @transform_6(%arg0: i32) -> (i32, i32, i32) {
    %c0_i32 = arith.constant 0 : i32
    %c0_i32_0 = arith.constant 0 : i32
    %c0_i32_1 = arith.constant 0 : i32
    return %arg0, %c0_i32, %c0_i32_0 : i32, i32, i32
  }
  func.func @transform_7(%arg0: i32) -> (i32, i32, i32) {
    %c0_i32 = arith.constant 0 : i32
    %c0_i32_0 = arith.constant 0 : i32
    %c0_i32_1 = arith.constant 0 : i32
    return %arg0, %c0_i32, %c0_i32_0 : i32, i32, i32
  }
}

</mosaic_0001>

<llo_original>
// kernel: tpu_custom_call.1
$region0: #{tpu_custom_call.1}
  #allocation0 [shape = 'u32[]', space=smem, size = 0x4, offset = 0x4, fixed_abs, tag = 'smem constant byte address 0x4 - core index']
  #allocation1 [shape = 'u32[144,128]{1,0:T(1,128)}', space=vmem, size = 0x12000, scoped, tag = 'internal scratch']
  %s0 = inlined_call_operand.vmem [shape: f32[2,32,64], index: 0, kind: input, shape index: {}]
  %s1 = inlined_call_operand.vmem [shape: f32[64,32], index: 1, kind: input, shape index: {}]
  %s2 = inlined_call_operand.vmem [shape: f32[64,1], index: 2, kind: input, shape index: {}]
  %s3 = inlined_call_operand.vmem [shape: f32[128,32], index: 3, kind: input, shape index: {}]
  %s4 = inlined_call_operand.vmem [shape: f32[128,32], index: 4, kind: input, shape index: {}]
  %s5 = inlined_call_operand.vmem [shape: f32[128,1], index: 5, kind: input, shape index: {}]
  %s6 = inlined_call_operand.hbm [shape: f32[2,32,64], index: 6, kind: output, shape index: {0}]
  %s7 = inlined_call_operand.vmem [shape: f32[2,64,8], index: 7, kind: output, shape index: {1}]
  %8 = xla_tuple %s6, %s7
  %s9 = sld [smem:[#allocation0]]
  $region65: #{tpu_custom_call.1} parent=0
    _
  %s11 = ssub.s32 1, %s9
  %s12 = scalar_select 0, %s11, %s9
  $region1: #{tpu_custom_call.1} parent=0
    #allocation2 [shape = 'u8[32768]{0}', space=vmem, size = 0x8000, scoped, tag = 'output window, operand 0']
    #allocation3 [shape = 's32[2]{0}', space=sflag, size = 0x8, scoped, tag = 'scoped memory for tpu_custom_call.1']
    %13 = vsyncpa [#allocation3], 0
    %s14 = scalar_lea.sflag [#allocation3], 1
    %15 = vsyncpa %s14, 0
    loop: start=0, step=1, limit=4
    $region2: #{tpu_custom_call.1} parent=1 // loop_pre_header
      _
    $region3: #{tpu_custom_call.1} parent=1 // loop_header
      %s17 = sphi 0, %s21
      %p18 = scmp.ge.s32.totalorder %s17, 4
      %s27 = sphi 0, %s29
      %s30 = sphi 0, %s27
      %s31 = sphi 0, %s30
      %s47 = sphi 0, %s31
      %s51 = sphi 0, %s51
      %s53 = sphi 0, %s51
      %s54 = sphi 0, %s53
      %s68 = sphi 0, %s54
      %s72 = sphi 0, %s72
      %s74 = sphi 0, %s72
      %s75 = sphi 0, %s74
      %s89 = sphi 0, %s75
      %s93 = sphi 0, %s93
      %s95 = sphi 0, %s93
      %s96 = sphi 0, %s95
      %s110 = sphi 0, %s96
      %s114 = sphi 0, %s114
      %s116 = sphi 0, %s114
      %s117 = sphi 0, %s116
      %s131 = sphi 0, %s117
      %s135 = sphi 0, %s135
      %s137 = sphi 0, %s135
      %s138 = sphi 0, %s137
      %s152 = sphi 0, %s138
      %s158 = sphi 0, %s160
      %s161 = sphi 0, %s158
      %s162 = sphi 0, %s161
      %s178 = sphi 0, %s162
      %s184 = sphi 0, %s186
      %s187 = sphi 0, %s184
      %s188 = sphi 0, %s187
      %s204 = sphi 0, %s188
    $region4: #{tpu_custom_call.1} parent=1 // loop_header_branch
      %20 = sbr.rel (%p18) target = $region8
    $region5: #{tpu_custom_call.1} parent=1 // loop_body
      %s22 = ssub.s32 %s17, 1
      %s23 = ssub.s32 %s17, 2
      %s24 = sadd.s32 %s17, 1
      %s25 = ssub.s32 %s17, %s24
      %p26 = scmp.eq.s32.totalorder %s25, 0
      %s28 = sadd.s32 %s27, 1
      %s29 = scalar_select %p26, %s27, %s28
      %p32 = pneg %p26
      %p33 = scmp.eq.s32.totalorder %s17, 1
      %p34 = por %p32, %p33
      %p35 = scmp.ne.s32.totalorder %s27, %s30
      %p36 = scmp.eq.s32.totalorder %s17, 0
      %p37 = por %p35, %p36
      %p38 = scmp.ne.s32.totalorder %s27, %s30
      %p39 = scmp.eq.s32.totalorder %s22, 1
      %p40 = por %p38, %p39
      %p41 = scmp.ne.s32.totalorder %s30, %s31
      %p42 = scmp.eq.s32.totalorder %s22, 0
      %p43 = por %p41, %p42
      %p44 = scmp.ne.s32.totalorder %s30, %s31
      %p45 = scmp.eq.s32.totalorder %s23, 1
      %p46 = por %p44, %p45
      %p48 = scmp.ne.s32.totalorder %s31, %s47
      %p49 = scmp.eq.s32.totalorder %s23, 0
      %p50 = por %p48, %p49
      %s52 = sadd.s32 %s51, 1
      %p55 = scmp.eq.s32.totalorder %s17, 1
      %p56 = scmp.ne.s32.totalorder %s51, %s53
      %p57 = scmp.eq.s32.totalorder %s17, 0
      %p58 = por %p56, %p57
      %p59 = scmp.ne.s32.totalorder %s51, %s53
      %p60 = scmp.eq.s32.totalorder %s22, 1
      %p61 = por %p59, %p60
      %p62 = scmp.ne.s32.totalorder %s53, %s54
      %p63 = scmp.eq.s32.totalorder %s22, 0
      %p64 = por %p62, %p63
      %p65 = scmp.ne.s32.totalorder %s53, %s54
      %p66 = scmp.eq.s32.totalorder %s23, 1
      %p67 = por %p65, %p66
      %p69 = scmp.ne.s32.totalorder %s54, %s68
      %p70 = scmp.eq.s32.totalorder %s23, 0
      %p71 = por %p69, %p70
      %s73 = sadd.s32 %s72, 1
      %p76 = scmp.eq.s32.totalorder %s17, 1
      %p77 = scmp.ne.s32.totalorder %s72, %s74
      %p78 = scmp.eq.s32.totalorder %s17, 0
      %p79 = por %p77, %p78
      %p80 = scmp.ne.s32.totalorder %s72, %s74
      %p81 = scmp.eq.s32.totalorder %s22, 1
      %p82 = por %p80, %p81
      %p83 = scmp.ne.s32.totalorder %s74, %s75
      %p84 = scmp.eq.s32.totalorder %s22, 0
      %p85 = por %p83, %p84
      %p86 = scmp.ne.s32.totalorder %s74, %s75
      %p87 = scmp.eq.s32.totalorder %s23, 1
      %p88 = por %p86, %p87
      %p90 = scmp.ne.s32.totalorder %s75, %s89
      %p91 = scmp.eq.s32.totalorder %s23, 0
      %p92 = por %p90, %p91
      %s94 = sadd.s32 %s93, 1
      %p97 = scmp.eq.s32.totalorder %s17, 1
      %p98 = scmp.ne.s32.totalorder %s93, %s95
      %p99 = scmp.eq.s32.totalorder %s17, 0
      %p100 = por %p98, %p99
      %p101 = scmp.ne.s32.totalorder %s93, %s95
      %p102 = scmp.eq.s32.totalorder %s22, 1
      %p103 = por %p101, %p102
      %p104 = scmp.ne.s32.totalorder %s95, %s96
      %p105 = scmp.eq.s32.totalorder %s22, 0
      %p106 = por %p104, %p105
      %p107 = scmp.ne.s32.totalorder %s95, %s96
      %p108 = scmp.eq.s32.totalorder %s23, 1
      %p109 = por %p107, %p108
      %p111 = scmp.ne.s32.totalorder %s96, %s110
      %p112 = scmp.eq.s32.totalorder %s23, 0
      %p113 = por %p111, %p112
      %s115 = sadd.s32 %s114, 1
      %p118 = scmp.eq.s32.totalorder %s17, 1
      %p119 = scmp.ne.s32.totalorder %s114, %s116
      %p120 = scmp.eq.s32.totalorder %s17, 0
      %p121 = por %p119, %p120
      %p122 = scmp.ne.s32.totalorder %s114, %s116
      %p123 = scmp.eq.s32.totalorder %s22, 1
      %p124 = por %p122, %p123
      %p125 = scmp.ne.s32.totalorder %s116, %s117
      %p126 = scmp.eq.s32.totalorder %s22, 0
      %p127 = por %p125, %p126
      %p128 = scmp.ne.s32.totalorder %s116, %s117
      %p129 = scmp.eq.s32.totalorder %s23, 1
      %p130 = por %p128, %p129
      %p132 = scmp.ne.s32.totalorder %s117, %s131
      %p133 = scmp.eq.s32.totalorder %s23, 0
      %p134 = por %p132, %p133
      %s136 = sadd.s32 %s135, 1
      %p139 = scmp.eq.s32.totalorder %s17, 1
      %p140 = scmp.ne.s32.totalorder %s135, %s137
      %p141 = scmp.eq.s32.totalorder %s17, 0
      %p142 = por %p140, %p141
      %p143 = scmp.ne.s32.totalorder %s135, %s137
      %p144 = scmp.eq.s32.totalorder %s22, 1
      %p145 = por %p143, %p144
      %p146 = scmp.ne.s32.totalorder %s137, %s138
      %p147 = scmp.eq.s32.totalorder %s22, 0
      %p148 = por %p146, %p147
      %p149 = scmp.ne.s32.totalorder %s137, %s138
      %p150 = scmp.eq.s32.totalorder %s23, 1
      %p151 = por %p149, %p150
      %p153 = scmp.ne.s32.totalorder %s138, %s152
      %p154 = scmp.eq.s32.totalorder %s23, 0
      %p155 = por %p153, %p154
      %s156 = ssub.s32 %s17, %s24
      %p157 = scmp.eq.s32.totalorder %s156, 0
      %s159 = sadd.s32 %s158, 1
      %s160 = scalar_select %p157, %s158, %s159
      %p163 = pneg %p157
      %p164 = scmp.eq.s32.totalorder %s17, 1
      %p165 = por %p163, %p164
      %p166 = scmp.ne.s32.totalorder %s158, %s161
      %p167 = scmp.eq.s32.totalorder %s17, 0
      %p168 = por %p166, %p167
      %p169 = scmp.ne.s32.totalorder %s158, %s161
      %p170 = scmp.eq.s32.totalorder %s22, 1
      %p171 = por %p169, %p170
      %p172 = scmp.ne.s32.totalorder %s161, %s162
      %p173 = scmp.eq.s32.totalorder %s22, 0
      %p174 = por %p172, %p173
      %p175 = scmp.ne.s32.totalorder %s161, %s162
      %p176 = scmp.eq.s32.totalorder %s23, 1
      %p177 = por %p175, %p176
      %p179 = scmp.ne.s32.totalorder %s162, %s178
      %p180 = scmp.eq.s32.totalorder %s23, 0
      %p181 = por %p179, %p180
      %s182 = ssub.s32 %s17, %s24
      %p183 = scmp.eq.s32.totalorder %s182, 0
      %s185 = sadd.s32 %s184, 1
      %s186 = scalar_select %p183, %s184, %s185
      %p189 = pneg %p183
      %p190 = scmp.eq.s32.totalorder %s17, 1
      %p191 = por %p189, %p190
      %p192 = scmp.ne.s32.totalorder %s184, %s187
      %p193 = scmp.eq.s32.totalorder %s17, 0
      %p194 = por %p192, %p193
      %p195 = scmp.ne.s32.totalorder %s184, %s187
      %p196 = scmp.eq.s32.totalorder %s22, 1
      %p197 = por %p195, %p196
      %p198 = scmp.ne.s32.totalorder %s187, %s188
      %p199 = scmp.eq.s32.totalorder %s22, 0
      %p200 = por %p198, %p199
      %p201 = scmp.ne.s32.totalorder %s187, %s188
      %p202 = scmp.eq.s32.totalorder %s23, 1
      %p203 = por %p201, %p202
      %p205 = scmp.ne.s32.totalorder %s188, %s204
      %p206 = scmp.eq.s32.totalorder %s23, 0
      %p207 = por %p205, %p206
      %p208 = scmp.le.s32.totalorder 1, %s17
      %p209 = scmp.lt.s32.totalorder %s17, 3
      %p210 = pnand %p208, %p209
      %p211 = pneg %p210
      // Predicated region
      $region9: #{tpu_custom_call.1} parent=5 // pred_check
        _
      $region10: #{tpu_custom_call.1} parent=5 // pred_check_branch
        %213 = sbr.rel (%p210) target = $region12
      $region11: #{tpu_custom_call.1} parent=5 // pred_region
        %s214 = ssub.s32 %s17, 1
        // Predicated region
        $region13: #{tpu_custom_call.1} parent=11 // pred_check
          %p215 = pneg %p64
        $region14: #{tpu_custom_call.1} parent=11 // pred_check_branch
          %217 = sbr.rel (%p215) target = $region16
        $region15: #{tpu_custom_call.1} parent=11 // pred_region
          _
        $region16: #{tpu_custom_call.1} parent=11 // pred_fallthru
          _
        // Predicated region
        $region17: #{tpu_custom_call.1} parent=11 // pred_check
          %p218 = pneg %p85
        $region18: #{tpu_custom_call.1} parent=11 // pred_check_branch
          %220 = sbr.rel (%p218) target = $region20
        $region19: #{tpu_custom_call.1} parent=11 // pred_region
          _
        $region20: #{tpu_custom_call.1} parent=11 // pred_fallthru
          _
        // Predicated region
        $region21: #{tpu_custom_call.1} parent=11 // pred_check
          %p221 = pneg %p106
        $region22: #{tpu_custom_call.1} parent=11 // pred_check_branch
          %223 = sbr.rel (%p221) target = $region24
        $region23: #{tpu_custom_call.1} parent=11 // pred_region
          _
        $region24: #{tpu_custom_call.1} parent=11 // pred_fallthru
          _
        // Predicated region
        $region25: #{tpu_custom_call.1} parent=11 // pred_check
          %p224 = pneg %p127
        $region26: #{tpu_custom_call.1} parent=11 // pred_check_branch
          %226 = sbr.rel (%p224) target = $region28
        $region27: #{tpu_custom_call.1} parent=11 // pred_region
          _
        $region28: #{tpu_custom_call.1} parent=11 // pred_fallthru
          _
        // Predicated region
        $region29: #{tpu_custom_call.1} parent=11 // pred_check
          %p227 = pneg %p148
        $region30: #{tpu_custom_call.1} parent=11 // pred_check_branch
          %229 = sbr.rel (%p227) target = $region32
        $region31: #{tpu_custom_call.1} parent=11 // pred_region
          _
        $region32: #{tpu_custom_call.1} parent=11 // pred_fallthru
          _
      $region12: #{tpu_custom_call.1} parent=5 // pred_fallthru
        _
      %p230 = scmp.lt.s32.totalorder %s17, 2
      // Predicated region
      $region33: #{tpu_custom_call.1} parent=5 // pred_check
        %p231 = pneg %p230
      $region34: #{tpu_custom_call.1} parent=5 // pred_check_branch
        %233 = sbr.rel (%p231) target = $region36
      $region35: #{tpu_custom_call.1} parent=5 // pred_region
        // Predicated region
        $region37: #{tpu_custom_call.1} parent=35 // pred_check
          %p234 = pneg %p37
        $region38: #{tpu_custom_call.1} parent=35 // pred_check_branch
          %236 = sbr.rel (%p234) target = $region40
        $region39: #{tpu_custom_call.1} parent=35 // pred_region
          %p237 = scmp.lt.s32.totalorder %s17, 1
          %s238 = scalar_select %p237, %s17, 1
          %s239 = smul.addr %s238, 4
          %s240 = smul.addr %s239, 8
          %s241 = scalar_lea.vmem %s0, %s240
        $region40: #{tpu_custom_call.1} parent=35 // pred_fallthru
          _
      $region36: #{tpu_custom_call.1} parent=5 // pred_fallthru
        _
      %p242 = scmp.le.s32.totalorder 1, %s17
      %p243 = scmp.lt.s32.totalorder %s17, 3
      %p244 = pnand %p242, %p243
      %p245 = pneg %p244
      // Predicated region
      $region41: #{tpu_custom_call.1} parent=5 // pred_check
        _
      $region42: #{tpu_custom_call.1} parent=5 // pred_check_branch
        %247 = sbr.rel (%p244) target = $region44
      $region43: #{tpu_custom_call.1} parent=5 // pred_region
        %s248 = ssub.s32 %s17, 1
        %p249 = scmp.lt.s32.totalorder %s22, 1
        %s250 = scalar_select %p249, %s22, 1
        %s251 = smul.addr %s250, 4
        %s252 = smul.addr %s251, 8
        %s253 = scalar_lea.vmem %s0, %s252
        %p254 = pneg %p43
        %p255 = pneg %p40
        %p256 = pneg %p64
        %p257 = pneg %p61
        %p258 = pneg %p85
        %p259 = pneg %p82
        %p260 = pneg %p106
        %p261 = pneg %p103
        %p262 = pneg %p127
        %p263 = pneg %p124
        %p264 = pneg %p148
        %p265 = pneg %p145
        %p266 = pneg %p174
        %p267 = pneg %p171
        %s268 = sand.u32 %s161, 1
        %s269 = scalar_lea.sflag [#allocation3], %s268
        %s270 = sand.u32 %s161, 1
        %s271 = smul.addr %s270, 32
        %s272 = scalar_lea.vmem [#allocation2], %s271
        %p273 = pneg %p200
        %p274 = pneg %p197
        %p275 = scmp.lt.s32.totalorder %s22, 1
        %s276 = scalar_select %p275, %s22, 1
        %s277 = smul.addr %s276, 8
        %s278 = smul.addr %s277, 8
        %s279 = scalar_lea.vmem %s7, %s278
        %p280 = scmp.lt.s32.totalorder %s22, 1
        %s281 = scalar_select %p280, %s22, 1
        %s282 = smul.addr %s281, 4
        %s283 = smul.addr %s282, 8
        %s284 = scalar_lea.vmem %s0, %s283
        %p285 = scmp.lt.s32.totalorder %s22, 1
        %s286 = scalar_select %p285, %s22, 1
        %s287 = smul.addr %s286, 8
        %s288 = smul.addr %s287, 8
        %s289 = scalar_lea.vmem %s7, %s288
        %v290 = vld [vmem:[%s1] sm:$0xff]
        %v291 = vld [vmem:[%s1 + $0x8] sm:$0xff]
        %v292 = vld [vmem:[%s1 + $0x10] sm:$0xff]
        %v293 = vld [vmem:[%s1 + $0x18] sm:$0xff]
        %v294 = vld [vmem:[%s1 + $0x20] sm:$0xff]
        %v295 = vld [vmem:[%s1 + $0x28] sm:$0xff]
        %v296 = vld [vmem:[%s1 + $0x30] sm:$0xff]
        %v297 = vld [vmem:[%s1 + $0x38] sm:$0xff]
        %v298 = vld [vmem:[%s2] sm:$0xff]
        %v299 = vld [vmem:[%s2 + $0x8] sm:$0xff]
        %v300 = vld [vmem:[%s2 + $0x10] sm:$0xff]
        %v301 = vld [vmem:[%s2 + $0x18] sm:$0xff]
        %v302 = vld [vmem:[%s2 + $0x20] sm:$0xff]
        %v303 = vld [vmem:[%s2 + $0x28] sm:$0xff]
        %v304 = vld [vmem:[%s2 + $0x30] sm:$0xff]
        %v305 = vld [vmem:[%s2 + $0x38] sm:$0xff]
        %v306 = vld [vmem:[%s3] sm:$0xff]
        %v307 = vld [vmem:[%s3 + $0x8] sm:$0xff]
        %v308 = vld [vmem:[%s3 + $0x10] sm:$0xff]
        %v309 = vld [vmem:[%s3 + $0x18] sm:$0xff]
        %v310 = vld [vmem:[%s3 + $0x20] sm:$0xff]
        %v311 = vld [vmem:[%s3 + $0x28] sm:$0xff]
        %v312 = vld [vmem:[%s3 + $0x30] sm:$0xff]
        %v313 = vld [vmem:[%s3 + $0x38] sm:$0xff]
        %v314 = vld [vmem:[%s3 + $0x40] sm:$0xff]
        %v315 = vld [vmem:[%s3 + $0x48] sm:$0xff]
        %v316 = vld [vmem:[%s3 + $0x50] sm:$0xff]
        %v317 = vld [vmem:[%s3 + $0x58] sm:$0xff]
        %v318 = vld [vmem:[%s3 + $0x60] sm:$0xff]
        %v319 = vld [vmem:[%s3 + $0x68] sm:$0xff]
        %v320 = vld [vmem:[%s3 + $0x70] sm:$0xff]
        %v321 = vld [vmem:[%s3 + $0x78] sm:$0xff]
        %v322 = vld [vmem:[%s4] sm:$0xff]
        %v323 = vld [vmem:[%s4 + $0x8] sm:$0xff]
        %v324 = vld [vmem:[%s4 + $0x10] sm:$0xff]
        %v325 = vld [vmem:[%s4 + $0x18] sm:$0xff]
        %v326 = vld [vmem:[%s4 + $0x20] sm:$0xff]
        %v327 = vld [vmem:[%s4 + $0x28] sm:$0xff]
        %v328 = vld [vmem:[%s4 + $0x30] sm:$0xff]
        %v329 = vld [vmem:[%s4 + $0x38] sm:$0xff]
        %v330 = vld [vmem:[%s4 + $0x40] sm:$0xff]
        %v331 = vld [vmem:[%s4 + $0x48] sm:$0xff]
        %v332 = vld [vmem:[%s4 + $0x50] sm:$0xff]
        %v333 = vld [vmem:[%s4 + $0x58] sm:$0xff]
        %v334 = vld [vmem:[%s4 + $0x60] sm:$0xff]
        %v335 = vld [vmem:[%s4 + $0x68] sm:$0xff]
        %v336 = vld [vmem:[%s4 + $0x70] sm:$0xff]
        %v337 = vld [vmem:[%s4 + $0x78] sm:$0xff]
        %v338 = vld [vmem:[%s5] sm:$0xff]
        %v339 = vld [vmem:[%s5 + $0x8] sm:$0xff]
        %v340 = vld [vmem:[%s5 + $0x10] sm:$0xff]
        %v341 = vld [vmem:[%s5 + $0x18] sm:$0xff]
        %v342 = vld [vmem:[%s5 + $0x20] sm:$0xff]
        %v343 = vld [vmem:[%s5 + $0x28] sm:$0xff]
        %v344 = vld [vmem:[%s5 + $0x30] sm:$0xff]
        %v345 = vld [vmem:[%s5 + $0x38] sm:$0xff]
        %v346 = vld [vmem:[%s5 + $0x40] sm:$0xff]
        %v347 = vld [vmem:[%s5 + $0x48] sm:$0xff]
        %v348 = vld [vmem:[%s5 + $0x50] sm:$0xff]
        %v349 = vld [vmem:[%s5 + $0x58] sm:$0xff]
        %v350 = vld [vmem:[%s5 + $0x60] sm:$0xff]
        %v351 = vld [vmem:[%s5 + $0x68] sm:$0xff]
        %v352 = vld [vmem:[%s5 + $0x70] sm:$0xff]
        %v353 = vld [vmem:[%s5 + $0x78] sm:$0xff]
        %v354 = vld [vmem:[%s284] sm:$0xff]
        %v355 = vld [vmem:[%s284 + $0x8] sm:$0xff]
        %v356 = vld [vmem:[%s284 + $0x10] sm:$0xff]
        %v357 = vld [vmem:[%s284 + $0x18] sm:$0xff]
        %359 = vset.pattern.permute.xlu0 0
        %360 = vperm.xlu0 %359, %v298
        %v361 = vpop.permute.xlu0 %360
        %364 = vset.pattern.permute.xlu0 0
        %365 = vperm.xlu0 %364, %v299
        %v366 = vpop.permute.xlu0 %365
        %369 = vset.pattern.permute.xlu0 0
        %370 = vperm.xlu0 %369, %v300
        %v371 = vpop.permute.xlu0 %370
        %374 = vset.pattern.permute.xlu0 0
        %375 = vperm.xlu0 %374, %v301
        %v376 = vpop.permute.xlu0 %375
        %379 = vset.pattern.permute.xlu0 0
        %380 = vperm.xlu0 %379, %v302
        %v381 = vpop.permute.xlu0 %380
        %384 = vset.pattern.permute.xlu0 0
        %385 = vperm.xlu0 %384, %v303
        %v386 = vpop.permute.xlu0 %385
        %389 = vset.pattern.permute.xlu0 0
        %390 = vperm.xlu0 %389, %v304
        %v391 = vpop.permute.xlu0 %390
        %394 = vset.pattern.permute.xlu0 0
        %395 = vperm.xlu0 %394, %v305
        %v396 = vpop.permute.xlu0 %395
        %vm398 = vcmask 261120
        %v400 = vsel %vm398, %v290, 0
        %v403 = vsel %vm398, %v291, 0
        %v406 = vsel %vm398, %v292, 0
        %v409 = vsel %vm398, %v293, 0
        %v412 = vsel %vm398, %v294, 0
        %v415 = vsel %vm398, %v295, 0
        %v418 = vsel %vm398, %v296, 0
        %v421 = vsel %vm398, %v297, 0
        %423 = vmatprep.subr.mxu0 0.0
        %424 = vmatpush1.msra.mxu0 %v354
        %425 = vmatprep.subr.mxu0 0.0
        %426 = vmatpush1.msra.mxu0 %v355
        %427 = vmatprep.subr.mxu0 0.0
        %428 = vmatpush1.msra.mxu0 %v356
        %429 = vmatprep.subr.mxu0 0.0
        %430 = vmatpush1.msra.mxu0 %v357
        %431 = vmatprep.subr.mxu0 0.0
        %432 = vmatpush1.msra.mxu0 0.0
        %433 = vmatprep.subr.mxu0 0.0
        %434 = vmatpush1.msra.mxu0 0.0
        %435 = vmatprep.subr.mxu0 0.0
        %436 = vmatpush1.msra.mxu0 0.0
        %437 = vmatprep.subr.mxu0 0.0
        %438 = vmatpush1.msra.mxu0 0.0
        %439 = vmatprep.subr.mxu0 0.0
        %440 = vmatpush1.msra.mxu0 0.0
        %441 = vmatprep.subr.mxu0 0.0
        %442 = vmatpush1.msra.mxu0 0.0
        %443 = vmatprep.subr.mxu0 0.0
        %444 = vmatpush1.msra.mxu0 0.0
        %445 = vmatprep.subr.mxu0 0.0
        %446 = vmatpush1.msra.mxu0 0.0
        %447 = vmatprep.subr.mxu0 0.0
        %448 = vmatpush1.msra.mxu0 0.0
        %449 = vmatprep.subr.mxu0 0.0
        %450 = vmatpush1.msra.mxu0 0.0
        %451 = vmatprep.subr.mxu0 0.0
        %452 = vmatpush1.msra.mxu0 0.0
        %453 = vmatprep.subr.mxu0 0.0
        %454 = vmatpush1.msra.mxu0 0.0
        %455 = vmatprep.subr.mxu0 0.0
        %456 = vmatpush1.msra.mxu0 0.0
        %457 = vmatprep.subr.mxu0 0.0
        %458 = vmatpush1.msra.mxu0 0.0
        %459 = vmatprep.subr.mxu0 0.0
        %460 = vmatpush1.msra.mxu0 0.0
        %461 = vmatprep.subr.mxu0 0.0
        %462 = vmatpush1.msra.mxu0 0.0
        %463 = vmatprep.subr.mxu0 0.0
        %464 = vmatpush1.msra.mxu0 0.0
        %465 = vmatprep.subr.mxu0 0.0
        %466 = vmatpush1.msra.mxu0 0.0
        %467 = vmatprep.subr.mxu0 0.0
        %468 = vmatpush1.msra.mxu0 0.0
        %469 = vmatprep.subr.mxu0 0.0
        %470 = vmatpush1.msra.mxu0 0.0
        %471 = vmatprep.subr.mxu0 0.0
        %472 = vmatpush1.msra.mxu0 0.0
        %473 = vmatprep.subr.mxu0 0.0
        %474 = vmatpush1.msra.mxu0 0.0
        %475 = vmatprep.subr.mxu0 0.0
        %476 = vmatpush1.msra.mxu0 0.0
        %477 = vmatprep.subr.mxu0 0.0
        %478 = vmatpush1.msra.mxu0 0.0
        %479 = vmatprep.subr.mxu0 0.0
        %480 = vmatpush1.msra.mxu0 0.0
        %481 = vmatprep.subr.mxu0 0.0
        %482 = vmatpush1.msra.mxu0 0.0
        %483 = vmatprep.subr.mxu0 0.0
        %484 = vmatpush1.msra.mxu0 0.0
        %485 = vmatprep.subr.mxu0 0.0
        %486 = vmatpush1.msra.mxu0 0.0
        %487 = vmatprep.mubr.f32.mxu0 0.0
        %488 = vmatmul.mubr.f32.gmra.mrb[0].mxu0 %v400
        %v489 = vpop.f32.mrb[0].mxu0
        %v490 = vadd.f32 %v361, %v489
        %v491 = vpop.f32.mrb[0].mxu0
        %492 = vmatprep.mubr.f32.mxu0 0.0
        %493 = vmatmul.mubr.f32.gmra.mrb[0].mxu0 %v403
        %v494 = vpop.f32.mrb[0].mxu0
        %v495 = vadd.f32 %v366, %v494
        %v496 = vpop.f32.mrb[0].mxu0
        %497 = vmatprep.mubr.f32.mxu0 0.0
        %498 = vmatmul.mubr.f32.gmra.mrb[0].mxu0 %v406
        %v499 = vpop.f32.mrb[0].mxu0
        %v500 = vadd.f32 %v371, %v499
        %v501 = vpop.f32.mrb[0].mxu0
        %502 = vmatprep.mubr.f32.mxu0 0.0
        %503 = vmatmul.mubr.f32.gmra.mrb[0].mxu0 %v409
        %v504 = vpop.f32.mrb[0].mxu0
        %v505 = vadd.f32 %v376, %v504
        %v506 = vpop.f32.mrb[0].mxu0
        %507 = vmatprep.mubr.f32.mxu0 0.0
        %508 = vmatmul.mubr.f32.gmra.mrb[0].mxu0 %v412
        %v509 = vpop.f32.mrb[0].mxu0
        %v510 = vadd.f32 %v381, %v509
        %v511 = vpop.f32.mrb[0].mxu0
        %512 = vmatprep.mubr.f32.mxu0 0.0
        %513 = vmatmul.mubr.f32.gmra.mrb[0].mxu0 %v415
        %v514 = vpop.f32.mrb[0].mxu0
        %v515 = vadd.f32 %v386, %v514
        %v516 = vpop.f32.mrb[0].mxu0
        %517 = vmatprep.mubr.f32.mxu0 0.0
        %518 = vmatmul.mubr.f32.gmra.mrb[0].mxu0 %v418
        %v519 = vpop.f32.mrb[0].mxu0
        %v520 = vadd.f32 %v391, %v519
        %v521 = vpop.f32.mrb[0].mxu0
        %522 = vmatprep.mubr.f32.mxu0 0.0
        %523 = vmatmul.mubr.f32.gmra.mrb[0].mxu0 %v421
        %v524 = vpop.f32.mrb[0].mxu0
        %v525 = vadd.f32 %v396, %v524
        %v526 = vpop.f32.mrb[0].mxu0
        %527 = vdwg.mxu0
        %v528 = vxor.u32 %v510, 2147483648
        %v529 = vxor.u32 %v515, 2147483648
        %v530 = vxor.u32 %v520, 2147483648
        %v531 = vxor.u32 %v525, 2147483648
        %v532 = vmul.f32 %v528, 1.442695
        %v533 = vpow.pop %v532
        %v534 = vmul.f32 %v529, 1.442695
        %v535 = vpow.pop %v534
        %v536 = vmul.f32 %v530, 1.442695
        %v537 = vpow.pop %v536
        %v538 = vmul.f32 %v531, 1.442695
        %v539 = vpow.pop %v538
        %v540 = vadd.f32 %v533, 1.0
        %v541 = vadd.f32 %v535, 1.0
        %v542 = vadd.f32 %v537, 1.0
        %v543 = vadd.f32 %v539, 1.0
        %v544 = vrcp.pop %v540
        %v545 = vmul.f32 1.0, %v544
        %v546 = vrcp.pop %v541
        %v547 = vmul.f32 1.0, %v546
        %v548 = vrcp.pop %v542
        %v549 = vmul.f32 1.0, %v548
        %v550 = vrcp.pop %v543
        %v551 = vmul.f32 1.0, %v550
        %v552 = vtanh.pop %v490
        %v553 = vtanh.pop %v495
        %v554 = vtanh.pop %v500
        %v555 = vtanh.pop %v505
        %v556 = vmul.f32 %v545, %v552
        %v557 = vmul.f32 %v547, %v553
        %v558 = vmul.f32 %v549, %v554
        %v559 = vmul.f32 %v551, %v555
        %vm560 = vcmask 523264
        %561 = vst.msk [vmem:[%s272] sm:$0xff] %vm560, %v556
        %562 = vst.msk [vmem:[%s272 + $0x8] sm:$0xff] %vm560, %v557
        %563 = vst.msk [vmem:[%s272 + $0x10] sm:$0xff] %vm560, %v558
        %564 = vst.msk [vmem:[%s272 + $0x18] sm:$0xff] %vm560, %v559
        %569 = vrot.lane.b32.xlu0 %v556, 96
        %v570 = vpop.permute.xlu0 %569
        %571 = vrot.lane.b32.xlu0 %v557, 96
        %v572 = vpop.permute.xlu0 %571
        %573 = vrot.lane.b32.xlu0 %v558, 96
        %v574 = vpop.permute.xlu0 %573
        %575 = vrot.lane.b32.xlu0 %v559, 96
        %v576 = vpop.permute.xlu0 %575
        %v582 = vsel %vm398, %v322, 0
        %v585 = vsel %vm398, %v323, 0
        %v588 = vsel %vm398, %v324, 0
        %v591 = vsel %vm398, %v325, 0
        %v594 = vsel %vm398, %v326, 0
        %v597 = vsel %vm398, %v327, 0
        %v600 = vsel %vm398, %v328, 0
        %v603 = vsel %vm398, %v329, 0
        %v606 = vsel %vm398, %v330, 0
        %v609 = vsel %vm398, %v331, 0
        %v612 = vsel %vm398, %v332, 0
        %v615 = vsel %vm398, %v333, 0
        %v618 = vsel %vm398, %v334, 0
        %v621 = vsel %vm398, %v335, 0
        %v624 = vsel %vm398, %v336, 0
        %v627 = vsel %vm398, %v337, 0
        %629 = vmatprep.subr.mxu0 0.0
        %630 = vmatpush1.msra.mxu0 %v570
        %631 = vmatprep.subr.mxu0 0.0
        %632 = vmatpush1.msra.mxu0 %v572
        %633 = vmatprep.subr.mxu0 0.0
        %634 = vmatpush1.msra.mxu0 %v574
        %635 = vmatprep.subr.mxu0 0.0
        %636 = vmatpush1.msra.mxu0 %v576
        %637 = vmatprep.subr.mxu0 0.0
        %638 = vmatpush1.msra.mxu0 0.0
        %639 = vmatprep.subr.mxu0 0.0
        %640 = vmatpush1.msra.mxu0 0.0
        %641 = vmatprep.subr.mxu0 0.0
        %642 = vmatpush1.msra.mxu0 0.0
        %643 = vmatprep.subr.mxu0 0.0
        %644 = vmatpush1.msra.mxu0 0.0
        %645 = vmatprep.subr.mxu0 0.0
        %646 = vmatpush1.msra.mxu0 0.0
        %647 = vmatprep.subr.mxu0 0.0
        %648 = vmatpush1.msra.mxu0 0.0
        %649 = vmatprep.subr.mxu0 0.0
        %650 = vmatpush1.msra.mxu0 0.0
        %651 = vmatprep.subr.mxu0 0.0
        %652 = vmatpush1.msra.mxu0 0.0
        %653 = vmatprep.subr.mxu0 0.0
        %654 = vmatpush1.msra.mxu0 0.0
        %655 = vmatprep.subr.mxu0 0.0
        %656 = vmatpush1.msra.mxu0 0.0
        %657 = vmatprep.subr.mxu0 0.0
        %658 = vmatpush1.msra.mxu0 0.0
        %659 = vmatprep.subr.mxu0 0.0
        %660 = vmatpush1.msra.mxu0 0.0
        %661 = vmatprep.subr.mxu0 0.0
        %662 = vmatpush1.msra.mxu0 0.0
        %663 = vmatprep.subr.mxu0 0.0
        %664 = vmatpush1.msra.mxu0 0.0
        %665 = vmatprep.subr.mxu0 0.0
        %666 = vmatpush1.msra.mxu0 0.0
        %667 = vmatprep.subr.mxu0 0.0
        %668 = vmatpush1.msra.mxu0 0.0
        %669 = vmatprep.subr.mxu0 0.0
        %670 = vmatpush1.msra.mxu0 0.0
        %671 = vmatprep.subr.mxu0 0.0
        %672 = vmatpush1.msra.mxu0 0.0
        %673 = vmatprep.subr.mxu0 0.0
        %674 = vmatpush1.msra.mxu0 0.0
        %675 = vmatprep.subr.mxu0 0.0
        %676 = vmatpush1.msra.mxu0 0.0
        %677 = vmatprep.subr.mxu0 0.0
        %678 = vmatpush1.msra.mxu0 0.0
        %679 = vmatprep.subr.mxu0 0.0
        %680 = vmatpush1.msra.mxu0 0.0
        %681 = vmatprep.subr.mxu0 0.0
        %682 = vmatpush1.msra.mxu0 0.0
        %683 = vmatprep.subr.mxu0 0.0
        %684 = vmatpush1.msra.mxu0 0.0
        %685 = vmatprep.subr.mxu0 0.0
        %686 = vmatpush1.msra.mxu0 0.0
        %687 = vmatprep.subr.mxu0 0.0
        %688 = vmatpush1.msra.mxu0 0.0
        %689 = vmatprep.subr.mxu0 0.0
        %690 = vmatpush1.msra.mxu0 0.0
        %691 = vmatprep.subr.mxu0 0.0
        %692 = vmatpush1.msra.mxu0 0.0
        %693 = vmatprep.mubr.f32.mxu0 0.0
        %694 = vmatmul.mubr.f32.gmra.mrb[0].mxu0 %v582
        %v695 = vpop.f32.mrb[0].mxu0
        %v696 = vadd.f32 0.0, %v695
        %v697 = vpop.f32.mrb[0].mxu0
        %698 = vmatprep.mubr.f32.mxu0 0.0
        %699 = vmatmul.mubr.f32.gmra.mrb[0].mxu0 %v585
        %v700 = vpop.f32.mrb[0].mxu0
        %v701 = vadd.f32 0.0, %v700
        %v702 = vpop.f32.mrb[0].mxu0
        %703 = vmatprep.mubr.f32.mxu0 0.0
        %704 = vmatmul.mubr.f32.gmra.mrb[0].mxu0 %v588
        %v705 = vpop.f32.mrb[0].mxu0
        %v706 = vadd.f32 0.0, %v705
        %v707 = vpop.f32.mrb[0].mxu0
        %708 = vmatprep.mubr.f32.mxu0 0.0
        %709 = vmatmul.mubr.f32.gmra.mrb[0].mxu0 %v591
        %v710 = vpop.f32.mrb[0].mxu0
        %v711 = vadd.f32 0.0, %v710
        %v712 = vpop.f32.mrb[0].mxu0
        %713 = vmatprep.mubr.f32.mxu0 0.0
        %714 = vmatmul.mubr.f32.gmra.mrb[0].mxu0 %v594
        %v715 = vpop.f32.mrb[0].mxu0
        %v716 = vadd.f32 0.0, %v715
        %v717 = vpop.f32.mrb[0].mxu0
        %718 = vmatprep.mubr.f32.mxu0 0.0
        %719 = vmatmul.mubr.f32.gmra.mrb[0].mxu0 %v597
        %v720 = vpop.f32.mrb[0].mxu0
        %v721 = vadd.f32 0.0, %v720
        %v722 = vpop.f32.mrb[0].mxu0
        %723 = vmatprep.mubr.f32.mxu0 0.0
        %724 = vmatmul.mubr.f32.gmra.mrb[0].mxu0 %v600
        %v725 = vpop.f32.mrb[0].mxu0
        %v726 = vadd.f32 0.0, %v725
        %v727 = vpop.f32.mrb[0].mxu0
        %728 = vmatprep.mubr.f32.mxu0 0.0
        %729 = vmatmul.mubr.f32.gmra.mrb[0].mxu0 %v603
        %v730 = vpop.f32.mrb[0].mxu0
        %v731 = vadd.f32 0.0, %v730
        %v732 = vpop.f32.mrb[0].mxu0
        %733 = vmatprep.mubr.f32.mxu0 0.0
        %734 = vmatmul.mubr.f32.gmra.mrb[0].mxu0 %v606
        %v735 = vpop.f32.mrb[0].mxu0
        %v736 = vadd.f32 0.0, %v735
        %v737 = vpop.f32.mrb[0].mxu0
        %738 = vmatprep.mubr.f32.mxu0 0.0
        %739 = vmatmul.mubr.f32.gmra.mrb[0].mxu0 %v609
        %v740 = vpop.f32.mrb[0].mxu0
        %v741 = vadd.f32 0.0, %v740
        %v742 = vpop.f32.mrb[0].mxu0
        %743 = vmatprep.mubr.f32.mxu0 0.0
        %744 = vmatmul.mubr.f32.gmra.mrb[0].mxu0 %v612
        %v745 = vpop.f32.mrb[0].mxu0
        %v746 = vadd.f32 0.0, %v745
        %v747 = vpop.f32.mrb[0].mxu0
        %748 = vmatprep.mubr.f32.mxu0 0.0
        %749 = vmatmul.mubr.f32.gmra.mrb[0].mxu0 %v615
        %v750 = vpop.f32.mrb[0].mxu0
        %v751 = vadd.f32 0.0, %v750
        %v752 = vpop.f32.mrb[0].mxu0
        %753 = vmatprep.mubr.f32.mxu0 0.0
        %754 = vmatmul.mubr.f32.gmra.mrb[0].mxu0 %v618
        %v755 = vpop.f32.mrb[0].mxu0
        %v756 = vadd.f32 0.0, %v755
        %v757 = vpop.f32.mrb[0].mxu0
        %758 = vmatprep.mubr.f32.mxu0 0.0
        %759 = vmatmul.mubr.f32.gmra.mrb[0].mxu0 %v621
        %v760 = vpop.f32.mrb[0].mxu0
        %v761 = vadd.f32 0.0, %v760
        %v762 = vpop.f32.mrb[0].mxu0
        %763 = vmatprep.mubr.f32.mxu0 0.0
        %764 = vmatmul.mubr.f32.gmra.mrb[0].mxu0 %v624
        %v765 = vpop.f32.mrb[0].mxu0
        %v766 = vadd.f32 0.0, %v765
        %v767 = vpop.f32.mrb[0].mxu0
        %768 = vmatprep.mubr.f32.mxu0 0.0
        %769 = vmatmul.mubr.f32.gmra.mrb[0].mxu0 %v627
        %v770 = vpop.f32.mrb[0].mxu0
        %v771 = vadd.f32 0.0, %v770
        %v772 = vpop.f32.mrb[0].mxu0
        %773 = vdwg.mxu0
        %v775 = vsel %vm398, %v306, 0
        %v778 = vsel %vm398, %v307, 0
        %v781 = vsel %vm398, %v308, 0
        %v784 = vsel %vm398, %v309, 0
        %v787 = vsel %vm398, %v310, 0
        %v790 = vsel %vm398, %v311, 0
        %v793 = vsel %vm398, %v312, 0
        %v796 = vsel %vm398, %v313, 0
        %v799 = vsel %vm398, %v314, 0
        %v802 = vsel %vm398, %v315, 0
        %v805 = vsel %vm398, %v316, 0
        %v808 = vsel %vm398, %v317, 0
        %v811 = vsel %vm398, %v318, 0
        %v814 = vsel %vm398, %v319, 0
        %v817 = vsel %vm398, %v320, 0
        %v820 = vsel %vm398, %v321, 0
        %822 = vmatprep.subr.mxu0 0.0
        %823 = vmatpush1.msra.mxu0 %v556
        %824 = vmatprep.subr.mxu0 0.0
        %825 = vmatpush1.msra.mxu0 %v557
        %826 = vmatprep.subr.mxu0 0.0
        %827 = vmatpush1.msra.mxu0 %v558
        %828 = vmatprep.subr.mxu0 0.0
        %829 = vmatpush1.msra.mxu0 %v559
        %830 = vmatprep.subr.mxu0 0.0
        %831 = vmatpush1.msra.mxu0 0.0
        %832 = vmatprep.subr.mxu0 0.0
        %833 = vmatpush1.msra.mxu0 0.0
        %834 = vmatprep.subr.mxu0 0.0
        %835 = vmatpush1.msra.mxu0 0.0
        %836 = vmatprep.subr.mxu0 0.0
        %837 = vmatpush1.msra.mxu0 0.0
        %838 = vmatprep.subr.mxu0 0.0
        %839 = vmatpush1.msra.mxu0 0.0
        %840 = vmatprep.subr.mxu0 0.0
        %841 = vmatpush1.msra.mxu0 0.0
        %842 = vmatprep.subr.mxu0 0.0
        %843 = vmatpush1.msra.mxu0 0.0
        %844 = vmatprep.subr.mxu0 0.0
        %845 = vmatpush1.msra.mxu0 0.0
        %846 = vmatprep.subr.mxu0 0.0
        %847 = vmatpush1.msra.mxu0 0.0
        %848 = vmatprep.subr.mxu0 0.0
        %849 = vmatpush1.msra.mxu0 0.0
        %850 = vmatprep.subr.mxu0 0.0
        %851 = vmatpush1.msra.mxu0 0.0
        %852 = vmatprep.subr.mxu0 0.0
        %853 = vmatpush1.msra.mxu0 0.0
        %854 = vmatprep.subr.mxu0 0.0
        %855 = vmatpush1.msra.mxu0 0.0
        %856 = vmatprep.subr.mxu0 0.0
        %857 = vmatpush1.msra.mxu0 0.0
        %858 = vmatprep.subr.mxu0 0.0
        %859 = vmatpush1.msra.mxu0 0.0
        %860 = vmatprep.subr.mxu0 0.0
        %861 = vmatpush1.msra.mxu0 0.0
        %862 = vmatprep.subr.mxu0 0.0
        %863 = vmatpush1.msra.mxu0 0.0
        %864 = vmatprep.subr.mxu0 0.0
        %865 = vmatpush1.msra.mxu0 0.0
        %866 = vmatprep.subr.mxu0 0.0
        %867 = vmatpush1.msra.mxu0 0.0
        %868 = vmatprep.subr.mxu0 0.0
        %869 = vmatpush1.msra.mxu0 0.0
        %870 = vmatprep.subr.mxu0 0.0
        %871 = vmatpush1.msra.mxu0 0.0
        %872 = vmatprep.subr.mxu0 0.0
        %873 = vmatpush1.msra.mxu0 0.0
        %874 = vmatprep.subr.mxu0 0.0
        %875 = vmatpush1.msra.mxu0 0.0
        %876 = vmatprep.subr.mxu0 0.0
        %877 = vmatpush1.msra.mxu0 0.0
        %878 = vmatprep.subr.mxu0 0.0
        %879 = vmatpush1.msra.mxu0 0.0
        %880 = vmatprep.subr.mxu0 0.0
        %881 = vmatpush1.msra.mxu0 0.0
        %882 = vmatprep.subr.mxu0 0.0
        %883 = vmatpush1.msra.mxu0 0.0
        %884 = vmatprep.subr.mxu0 0.0
        %885 = vmatpush1.msra.mxu0 0.0
        %886 = vmatprep.mubr.f32.mxu0 0.0
        %887 = vmatmul.mubr.f32.gmra.mrb[0].mxu0 %v775
        %v888 = vpop.f32.mrb[0].mxu0
        %v889 = vadd.f32 %v696, %v888
        %v890 = vpop.f32.mrb[0].mxu0
        %891 = vmatprep.mubr.f32.mxu0 0.0
        %892 = vmatmul.mubr.f32.gmra.mrb[0].mxu0 %v778
        %v893 = vpop.f32.mrb[0].mxu0
        %v894 = vadd.f32 %v701, %v893
        %v895 = vpop.f32.mrb[0].mxu0
        %896 = vmatprep.mubr.f32.mxu0 0.0
        %897 = vmatmul.mubr.f32.gmra.mrb[0].mxu0 %v781
        %v898 = vpop.f32.mrb[0].mxu0
        %v899 = vadd.f32 %v706, %v898
        %v900 = vpop.f32.mrb[0].mxu0
        %901 = vmatprep.mubr.f32.mxu0 0.0
        %902 = vmatmul.mubr.f32.gmra.mrb[0].mxu0 %v784
        %v903 = vpop.f32.mrb[0].mxu0
        %v904 = vadd.f32 %v711, %v903
        %v905 = vpop.f32.mrb[0].mxu0
        %906 = vmatprep.mubr.f32.mxu0 0.0
        %907 = vmatmul.mubr.f32.gmra.mrb[0].mxu0 %v787
        %v908 = vpop.f32.mrb[0].mxu0
        %v909 = vadd.f32 %v716, %v908
        %v910 = vpop.f32.mrb[0].mxu0
        %911 = vmatprep.mubr.f32.mxu0 0.0
        %912 = vmatmul.mubr.f32.gmra.mrb[0].mxu0 %v790
        %v913 = vpop.f32.mrb[0].mxu0
        %v914 = vadd.f32 %v721, %v913
        %v915 = vpop.f32.mrb[0].mxu0
        %916 = vmatprep.mubr.f32.mxu0 0.0
        %917 = vmatmul.mubr.f32.gmra.mrb[0].mxu0 %v793
        %v918 = vpop.f32.mrb[0].mxu0
        %v919 = vadd.f32 %v726, %v918
        %v920 = vpop.f32.mrb[0].mxu0
        %921 = vmatprep.mubr.f32.mxu0 0.0
        %922 = vmatmul.mubr.f32.gmra.mrb[0].mxu0 %v796
        %v923 = vpop.f32.mrb[0].mxu0
        %v924 = vadd.f32 %v731, %v923
        %v925 = vpop.f32.mrb[0].mxu0
        %926 = vmatprep.mubr.f32.mxu0 0.0
        %927 = vmatmul.mubr.f32.gmra.mrb[0].mxu0 %v799
        %v928 = vpop.f32.mrb[0].mxu0
        %v929 = vadd.f32 %v736, %v928
        %v930 = vpop.f32.mrb[0].mxu0
        %931 = vmatprep.mubr.f32.mxu0 0.0
        %932 = vmatmul.mubr.f32.gmra.mrb[0].mxu0 %v802
        %v933 = vpop.f32.mrb[0].mxu0
        %v934 = vadd.f32 %v741, %v933
        %v935 = vpop.f32.mrb[0].mxu0
        %936 = vmatprep.mubr.f32.mxu0 0.0
        %937 = vmatmul.mubr.f32.gmra.mrb[0].mxu0 %v805
        %v938 = vpop.f32.mrb[0].mxu0
        %v939 = vadd.f32 %v746, %v938
        %v940 = vpop.f32.mrb[0].mxu0
        %941 = vmatprep.mubr.f32.mxu0 0.0
        %942 = vmatmul.mubr.f32.gmra.mrb[0].mxu0 %v808
        %v943 = vpop.f32.mrb[0].mxu0
        %v944 = vadd.f32 %v751, %v943
        %v945 = vpop.f32.mrb[0].mxu0
        %946 = vmatprep.mubr.f32.mxu0 0.0
        %947 = vmatmul.mubr.f32.gmra.mrb[0].mxu0 %v811
        %v948 = vpop.f32.mrb[0].mxu0
        %v949 = vadd.f32 %v756, %v948
        %v950 = vpop.f32.mrb[0].mxu0
        %951 = vmatprep.mubr.f32.mxu0 0.0
        %952 = vmatmul.mubr.f32.gmra.mrb[0].mxu0 %v814
        %v953 = vpop.f32.mrb[0].mxu0
        %v954 = vadd.f32 %v761, %v953
        %v955 = vpop.f32.mrb[0].mxu0
        %956 = vmatprep.mubr.f32.mxu0 0.0
        %957 = vmatmul.mubr.f32.gmra.mrb[0].mxu0 %v817
        %v958 = vpop.f32.mrb[0].mxu0
        %v959 = vadd.f32 %v766, %v958
        %v960 = vpop.f32.mrb[0].mxu0
        %961 = vmatprep.mubr.f32.mxu0 0.0
        %962 = vmatmul.mubr.f32.gmra.mrb[0].mxu0 %v820
        %v963 = vpop.f32.mrb[0].mxu0
        %v964 = vadd.f32 %v771, %v963
        %v965 = vpop.f32.mrb[0].mxu0
        %966 = vdwg.mxu0
        %968 = vset.pattern.permute.xlu0 0
        %969 = vperm.xlu0 %968, %v338
        %v970 = vpop.permute.xlu0 %969
        %973 = vset.pattern.permute.xlu0 0
        %974 = vperm.xlu0 %973, %v339
        %v975 = vpop.permute.xlu0 %974
        %978 = vset.pattern.permute.xlu0 0
        %979 = vperm.xlu0 %978, %v340
        %v980 = vpop.permute.xlu0 %979
        %983 = vset.pattern.permute.xlu0 0
        %984 = vperm.xlu0 %983, %v341
        %v985 = vpop.permute.xlu0 %984
        %988 = vset.pattern.permute.xlu0 0
        %989 = vperm.xlu0 %988, %v342
        %v990 = vpop.permute.xlu0 %989
        %993 = vset.pattern.permute.xlu0 0
        %994 = vperm.xlu0 %993, %v343
        %v995 = vpop.permute.xlu0 %994
        %998 = vset.pattern.permute.xlu0 0
        %999 = vperm.xlu0 %998, %v344
        %v1000 = vpop.permute.xlu0 %999
        %1003 = vset.pattern.permute.xlu0 0
        %1004 = vperm.xlu0 %1003, %v345
        %v1005 = vpop.permute.xlu0 %1004
        %1008 = vset.pattern.permute.xlu0 0
        %1009 = vperm.xlu0 %1008, %v346
        %v1010 = vpop.permute.xlu0 %1009
        %1013 = vset.pattern.permute.xlu0 0
        %1014 = vperm.xlu0 %1013, %v347
        %v1015 = vpop.permute.xlu0 %1014
        %1018 = vset.pattern.permute.xlu0 0
        %1019 = vperm.xlu0 %1018, %v348
        %v1020 = vpop.permute.xlu0 %1019
        %1023 = vset.pattern.permute.xlu0 0
        %1024 = vperm.xlu0 %1023, %v349
        %v1025 = vpop.permute.xlu0 %1024
        %1028 = vset.pattern.permute.xlu0 0
        %1029 = vperm.xlu0 %1028, %v350
        %v1030 = vpop.permute.xlu0 %1029
        %1033 = vset.pattern.permute.xlu0 0
        %1034 = vperm.xlu0 %1033, %v351
        %v1035 = vpop.permute.xlu0 %1034
        %1038 = vset.pattern.permute.xlu0 0
        %1039 = vperm.xlu0 %1038, %v352
        %v1040 = vpop.permute.xlu0 %1039
        %1043 = vset.pattern.permute.xlu0 0
        %1044 = vperm.xlu0 %1043, %v353
        %v1045 = vpop.permute.xlu0 %1044
        %v1047 = vadd.f32 %v889, %v970
        %v1048 = vadd.f32 %v894, %v975
        %v1049 = vadd.f32 %v899, %v980
        %v1050 = vadd.f32 %v904, %v985
        %v1051 = vadd.f32 %v909, %v990
        %v1052 = vadd.f32 %v914, %v995
        %v1053 = vadd.f32 %v919, %v1000
        %v1054 = vadd.f32 %v924, %v1005
        %v1055 = vadd.f32 %v929, %v1010
        %v1056 = vadd.f32 %v934, %v1015
        %v1057 = vadd.f32 %v939, %v1020
        %v1058 = vadd.f32 %v944, %v1025
        %v1059 = vadd.f32 %v949, %v1030
        %v1060 = vadd.f32 %v954, %v1035
        %v1061 = vadd.f32 %v959, %v1040
        %v1062 = vadd.f32 %v964, %v1045
        %v1063 = vxor.u32 %v1047, 2147483648
        %v1064 = vxor.u32 %v1048, 2147483648
        %v1065 = vxor.u32 %v1049, 2147483648
        %v1066 = vxor.u32 %v1050, 2147483648
        %v1067 = vxor.u32 %v1051, 2147483648
        %v1068 = vxor.u32 %v1052, 2147483648
        %v1069 = vxor.u32 %v1053, 2147483648
        %v1070 = vxor.u32 %v1054, 2147483648
        %v1071 = vxor.u32 %v1055, 2147483648
        %v1072 = vxor.u32 %v1056, 2147483648
        %v1073 = vxor.u32 %v1057, 2147483648
        %v1074 = vxor.u32 %v1058, 2147483648
        %v1075 = vmul.f32 %v1063, 1.442695
        %v1076 = vpow.pop %v1075
        %v1077 = vmul.f32 %v1064, 1.442695
        %v1078 = vpow.pop %v1077
        %v1079 = vmul.f32 %v1065, 1.442695
        %v1080 = vpow.pop %v1079
        %v1081 = vmul.f32 %v1066, 1.442695
        %v1082 = vpow.pop %v1081
        %v1083 = vmul.f32 %v1067, 1.442695
        %v1084 = vpow.pop %v1083
        %v1085 = vmul.f32 %v1068, 1.442695
        %v1086 = vpow.pop %v1085
        %v1087 = vmul.f32 %v1069, 1.442695
        %v1088 = vpow.pop %v1087
        %v1089 = vmul.f32 %v1070, 1.442695
        %v1090 = vpow.pop %v1089
        %v1091 = vmul.f32 %v1071, 1.442695
        %v1092 = vpow.pop %v1091
        %v1093 = vmul.f32 %v1072, 1.442695
        %v1094 = vpow.pop %v1093
        %v1095 = vmul.f32 %v1073, 1.442695
        %v1096 = vpow.pop %v1095
        %v1097 = vmul.f32 %v1074, 1.442695
        %v1098 = vpow.pop %v1097
        %v1099 = vadd.f32 %v1076, 1.0
        %v1100 = vadd.f32 %v1078, 1.0
        %v1101 = vadd.f32 %v1080, 1.0
        %v1102 = vadd.f32 %v1082, 1.0
        %v1103 = vadd.f32 %v1084, 1.0
        %v1104 = vadd.f32 %v1086, 1.0
        %v1105 = vadd.f32 %v1088, 1.0
        %v1106 = vadd.f32 %v1090, 1.0
        %v1107 = vadd.f32 %v1092, 1.0
        %v1108 = vadd.f32 %v1094, 1.0
        %v1109 = vadd.f32 %v1096, 1.0
        %v1110 = vadd.f32 %v1098, 1.0
        %v1111 = vrcp.pop %v1099
        %v1112 = vmul.f32 1.0, %v1111
        %v1113 = vrcp.pop %v1100
        %v1114 = vmul.f32 1.0, %v1113
        %v1115 = vrcp.pop %v1101
        %v1116 = vmul.f32 1.0, %v1115
        %v1117 = vrcp.pop %v1102
        %v1118 = vmul.f32 1.0, %v1117
        %v1119 = vrcp.pop %v1103
        %v1120 = vmul.f32 1.0, %v1119
        %v1121 = vrcp.pop %v1104
        %v1122 = vmul.f32 1.0, %v1121
        %v1123 = vrcp.pop %v1105
        %v1124 = vmul.f32 1.0, %v1123
        %v1125 = vrcp.pop %v1106
        %v1126 = vmul.f32 1.0, %v1125
        %v1127 = vrcp.pop %v1107
        %v1128 = vmul.f32 1.0, %v1127
        %v1129 = vrcp.pop %v1108
        %v1130 = vmul.f32 1.0, %v1129
        %v1131 = vrcp.pop %v1109
        %v1132 = vmul.f32 1.0, %v1131
        %v1133 = vrcp.pop %v1110
        %v1134 = vmul.f32 1.0, %v1133
        %v1135 = vtanh.pop %v1059
        %v1136 = vtanh.pop %v1060
        %v1137 = vtanh.pop %v1061
        %v1138 = vtanh.pop %v1062
        %v1139 = vmul.f32 %v1112, %v1135
        %v1140 = vmul.f32 %v1114, %v1136
        %v1141 = vmul.f32 %v1116, %v1137
        %v1142 = vmul.f32 %v1118, %v1138
        %v1143 = vmul.f32 %v1120, %v490
        %v1144 = vmul.f32 %v1122, %v495
        %v1145 = vmul.f32 %v1124, %v500
        %v1146 = vmul.f32 %v1126, %v505
        %v1147 = vadd.f32 %v1139, %v1143
        %v1148 = vadd.f32 %v1140, %v1144
        %v1149 = vadd.f32 %v1141, %v1145
        %v1150 = vadd.f32 %v1142, %v1146
        %1155 = vrot.lane.b32.xlu0 %v490, 96
        %v1156 = vpop.permute.xlu0 %1155
        %1157 = vrot.lane.b32.xlu0 %v495, 96
        %v1158 = vpop.permute.xlu0 %1157
        %1159 = vrot.lane.b32.xlu0 %v500, 96
        %v1160 = vpop.permute.xlu0 %1159
        %1161 = vrot.lane.b32.xlu0 %v505, 96
        %v1162 = vpop.permute.xlu0 %1161
        %v1167 = vmul.f32 %v1128, %v1156
        %v1168 = vmul.f32 %v1130, %v1158
        %v1169 = vmul.f32 %v1132, %v1160
        %v1170 = vmul.f32 %v1134, %v1162
        %v1171 = vadd.f32 %v1147, %v1167
        %v1172 = vadd.f32 %v1148, %v1168
        %v1173 = vadd.f32 %v1149, %v1169
        %v1174 = vadd.f32 %v1150, %v1170
        %v1175 = vtanh.pop %v1171
        %v1176 = vtanh.pop %v1172
        %v1177 = vtanh.pop %v1173
        %v1178 = vtanh.pop %v1174
        %1183 = vrot.lane.b32.xlu0 %v1175, 112
        %v1184 = vpop.permute.xlu0 %1183
        %1185 = vrot.lane.b32.xlu0 %v1176, 112
        %v1186 = vpop.permute.xlu0 %1185
        %1187 = vrot.lane.b32.xlu0 %v1177, 112
        %v1188 = vpop.permute.xlu0 %1187
        %1189 = vrot.lane.b32.xlu0 %v1178, 112
        %v1190 = vpop.permute.xlu0 %1189
        %1195 = vmatprep.subr.mxu0 0.0
        %1196 = vmatpush1.msra.mxu0 %v1184
        %1197 = vmatprep.subr.mxu0 0.0
        %1198 = vmatpush1.msra.mxu0 %v1186
        %1199 = vmatprep.subr.mxu0 0.0
        %1200 = vmatpush1.msra.mxu0 %v1188
        %1201 = vmatprep.subr.mxu0 0.0
        %1202 = vmatpush1.msra.mxu0 %v1190
        %1203 = vmatprep.subr.mxu0 0.0
        %1204 = vmatpush1.msra.mxu0 0.0
        %1205 = vmatprep.subr.mxu0 0.0
        %1206 = vmatpush1.msra.mxu0 0.0
        %1207 = vmatprep.subr.mxu0 0.0
        %1208 = vmatpush1.msra.mxu0 0.0
        %1209 = vmatprep.subr.mxu0 0.0
        %1210 = vmatpush1.msra.mxu0 0.0
        %1211 = vmatprep.subr.mxu0 0.0
        %1212 = vmatpush1.msra.mxu0 0.0
        %1213 = vmatprep.subr.mxu0 0.0
        %1214 = vmatpush1.msra.mxu0 0.0
        %1215 = vmatprep.subr.mxu0 0.0
        %1216 = vmatpush1.msra.mxu0 0.0
        %1217 = vmatprep.subr.mxu0 0.0
        %1218 = vmatpush1.msra.mxu0 0.0
        %1219 = vmatprep.subr.mxu0 0.0
        %1220 = vmatpush1.msra.mxu0 0.0
        %1221 = vmatprep.subr.mxu0 0.0
        %1222 = vmatpush1.msra.mxu0 0.0
        %1223 = vmatprep.subr.mxu0 0.0
        %1224 = vmatpush1.msra.mxu0 0.0
        %1225 = vmatprep.subr.mxu0 0.0
        %1226 = vmatpush1.msra.mxu0 0.0
        %1227 = vmatprep.subr.mxu0 0.0
        %1228 = vmatpush1.msra.mxu0 0.0
        %1229 = vmatprep.subr.mxu0 0.0
        %1230 = vmatpush1.msra.mxu0 0.0
        %1231 = vmatprep.subr.mxu0 0.0
        %1232 = vmatpush1.msra.mxu0 0.0
        %1233 = vmatprep.subr.mxu0 0.0
        %1234 = vmatpush1.msra.mxu0 0.0
        %1235 = vmatprep.subr.mxu0 0.0
        %1236 = vmatpush1.msra.mxu0 0.0
        %1237 = vmatprep.subr.mxu0 0.0
        %1238 = vmatpush1.msra.mxu0 0.0
        %1239 = vmatprep.subr.mxu0 0.0
        %1240 = vmatpush1.msra.mxu0 0.0
        %1241 = vmatprep.subr.mxu0 0.0
        %1242 = vmatpush1.msra.mxu0 0.0
        %1243 = vmatprep.subr.mxu0 0.0
        %1244 = vmatpush1.msra.mxu0 0.0
        %1245 = vmatprep.subr.mxu0 0.0
        %1246 = vmatpush1.msra.mxu0 0.0
        %1247 = vmatprep.subr.mxu0 0.0
        %1248 = vmatpush1.msra.mxu0 0.0
        %1249 = vmatprep.subr.mxu0 0.0
        %1250 = vmatpush1.msra.mxu0 0.0
        %1251 = vmatprep.subr.mxu0 0.0
        %1252 = vmatpush1.msra.mxu0 0.0
        %1253 = vmatprep.subr.mxu0 0.0
        %1254 = vmatpush1.msra.mxu0 0.0
        %1255 = vmatprep.subr.mxu0 0.0
        %1256 = vmatpush1.msra.mxu0 0.0
        %1257 = vmatprep.subr.mxu0 0.0
        %1258 = vmatpush1.msra.mxu0 0.0
        %1259 = vmatprep.mubr.f32.mxu0 0.0
        %1260 = vmatmul.mubr.f32.gmra.mrb[0].mxu0 %v582
        %v1261 = vpop.f32.mrb[0].mxu0
        %v1262 = vadd.f32 0.0, %v1261
        %v1263 = vpop.f32.mrb[0].mxu0
        %1264 = vmatprep.mubr.f32.mxu0 0.0
        %1265 = vmatmul.mubr.f32.gmra.mrb[0].mxu0 %v585
        %v1266 = vpop.f32.mrb[0].mxu0
        %v1267 = vadd.f32 0.0, %v1266
        %v1268 = vpop.f32.mrb[0].mxu0
        %1269 = vmatprep.mubr.f32.mxu0 0.0
        %1270 = vmatmul.mubr.f32.gmra.mrb[0].mxu0 %v588
        %v1271 = vpop.f32.mrb[0].mxu0
        %v1272 = vadd.f32 0.0, %v1271
        %v1273 = vpop.f32.mrb[0].mxu0
        %1274 = vmatprep.mubr.f32.mxu0 0.0
        %1275 = vmatmul.mubr.f32.gmra.mrb[0].mxu0 %v591
        %v1276 = vpop.f32.mrb[0].mxu0
        %v1277 = vadd.f32 0.0, %v1276
        %v1278 = vpop.f32.mrb[0].mxu0
        %1279 = vmatprep.mubr.f32.mxu0 0.0
        %1280 = vmatmul.mubr.f32.gmra.mrb[0].mxu0 %v594
        %v1281 = vpop.f32.mrb[0].mxu0
        %v1282 = vadd.f32 0.0, %v1281
        %v1283 = vpop.f32.mrb[0].mxu0
        %1284 = vmatprep.mubr.f32.mxu0 0.0
        %1285 = vmatmul.mubr.f32.gmra.mrb[0].mxu0 %v597
        %v1286 = vpop.f32.mrb[0].mxu0
        %v1287 = vadd.f32 0.0, %v1286
        %v1288 = vpop.f32.mrb[0].mxu0
        %1289 = vmatprep.mubr.f32.mxu0 0.0
        %1290 = vmatmul.mubr.f32.gmra.mrb[0].mxu0 %v600
        %v1291 = vpop.f32.mrb[0].mxu0
        %v1292 = vadd.f32 0.0, %v1291
        %v1293 = vpop.f32.mrb[0].mxu0
        %1294 = vmatprep.mubr.f32.mxu0 0.0
        %1295 = vmatmul.mubr.f32.gmra.mrb[0].mxu0 %v603
        %v1296 = vpop.f32.mrb[0].mxu0
        %v1297 = vadd.f32 0.0, %v1296
        %v1298 = vpop.f32.mrb[0].mxu0
        %1299 = vmatprep.mubr.f32.mxu0 0.0
        %1300 = vmatmul.mubr.f32.gmra.mrb[0].mxu0 %v606
        %v1301 = vpop.f32.mrb[0].mxu0
        %v1302 = vadd.f32 0.0, %v1301
        %v1303 = vpop.f32.mrb[0].mxu0
        %1304 = vmatprep.mubr.f32.mxu0 0.0
        %1305 = vmatmul.mubr.f32.gmra.mrb[0].mxu0 %v609
        %v1306 = vpop.f32.mrb[0].mxu0
        %v1307 = vadd.f32 0.0, %v1306
        %v1308 = vpop.f32.mrb[0].mxu0
        %1309 = vmatprep.mubr.f32.mxu0 0.0
        %1310 = vmatmul.mubr.f32.gmra.mrb[0].mxu0 %v612
        %v1311 = vpop.f32.mrb[0].mxu0
        %v1312 = vadd.f32 0.0, %v1311
        %v1313 = vpop.f32.mrb[0].mxu0
        %1314 = vmatprep.mubr.f32.mxu0 0.0
        %1315 = vmatmul.mubr.f32.gmra.mrb[0].mxu0 %v615
        %v1316 = vpop.f32.mrb[0].mxu0
        %v1317 = vadd.f32 0.0, %v1316
        %v1318 = vpop.f32.mrb[0].mxu0
        %1319 = vmatprep.mubr.f32.mxu0 0.0
        %1320 = vmatmul.mubr.f32.gmra.mrb[0].mxu0 %v618
        %v1321 = vpop.f32.mrb[0].mxu0
        %v1322 = vadd.f32 0.0, %v1321
        %v1323 = vpop.f32.mrb[0].mxu0
        %1324 = vmatprep.mubr.f32.mxu0 0.0
        %1325 = vmatmul.mubr.f32.gmra.mrb[0].mxu0 %v621
        %v1326 = vpop.f32.mrb[0].mxu0
        %v1327 = vadd.f32 0.0, %v1326
        %v1328 = vpop.f32.mrb[0].mxu0
        %1329 = vmatprep.mubr.f32.mxu0 0.0
        %1330 = vmatmul.mubr.f32.gmra.mrb[0].mxu0 %v624
        %v1331 = vpop.f32.mrb[0].mxu0
        %v1332 = vadd.f32 0.0, %v1331
        %v1333 = vpop.f32.mrb[0].mxu0
        %1334 = vmatprep.mubr.f32.mxu0 0.0
        %1335 = vmatmul.mubr.f32.gmra.mrb[0].mxu0 %v627
        %v1336 = vpop.f32.mrb[0].mxu0
        %v1337 = vadd.f32 0.0, %v1336
        %v1338 = vpop.f32.mrb[0].mxu0
        %1339 = vdwg.mxu0
        %1340 = vmatprep.subr.mxu0 0.0
        %1341 = vmatpush1.msra.mxu0 %v1175
        %1342 = vmatprep.subr.mxu0 0.0
        %1343 = vmatpush1.msra.mxu0 %v1176
        %1344 = vmatprep.subr.mxu0 0.0
        %1345 = vmatpush1.msra.mxu0 %v1177
        %1346 = vmatprep.subr.mxu0 0.0
        %1347 = vmatpush1.msra.mxu0 %v1178
        %1348 = vmatprep.subr.mxu0 0.0
        %1349 = vmatpush1.msra.mxu0 0.0
        %1350 = vmatprep.subr.mxu0 0.0
        %1351 = vmatpush1.msra.mxu0 0.0
        %1352 = vmatprep.subr.mxu0 0.0
        %1353 = vmatpush1.msra.mxu0 0.0
        %1354 = vmatprep.subr.mxu0 0.0
        %1355 = vmatpush1.msra.mxu0 0.0
        %1356 = vmatprep.subr.mxu0 0.0
        %1357 = vmatpush1.msra.mxu0 0.0
        %1358 = vmatprep.subr.mxu0 0.0
        %1359 = vmatpush1.msra.mxu0 0.0
        %1360 = vmatprep.subr.mxu0 0.0
        %1361 = vmatpush1.msra.mxu0 0.0
        %1362 = vmatprep.subr.mxu0 0.0
        %1363 = vmatpush1.msra.mxu0 0.0
        %1364 = vmatprep.subr.mxu0 0.0
        %1365 = vmatpush1.msra.mxu0 0.0
        %1366 = vmatprep.subr.mxu0 0.0
        %1367 = vmatpush1.msra.mxu0 0.0
        %1368 = vmatprep.subr.mxu0 0.0
        %1369 = vmatpush1.msra.mxu0 0.0
        %1370 = vmatprep.subr.mxu0 0.0
        %1371 = vmatpush1.msra.mxu0 0.0
        %1372 = vmatprep.subr.mxu0 0.0
        %1373 = vmatpush1.msra.mxu0 0.0
        %1374 = vmatprep.subr.mxu0 0.0
        %1375 = vmatpush1.msra.mxu0 0.0
        %1376 = vmatprep.subr.mxu0 0.0
        %1377 = vmatpush1.msra.mxu0 0.0
        %1378 = vmatprep.subr.mxu0 0.0
        %1379 = vmatpush1.msra.mxu0 0.0
        %1380 = vmatprep.subr.mxu0 0.0
        %1381 = vmatpush1.msra.mxu0 0.0
        %1382 = vmatprep.subr.mxu0 0.0
        %1383 = vmatpush1.msra.mxu0 0.0
        %1384 = vmatprep.subr.mxu0 0.0
        %1385 = vmatpush1.msra.mxu0 0.0
        %1386 = vmatprep.subr.mxu0 0.0
        %1387 = vmatpush1.msra.mxu0 0.0
        %1388 = vmatprep.subr.mxu0 0.0
        %1389 = vmatpush1.msra.mxu0 0.0
        %1390 = vmatprep.subr.mxu0 0.0
        %1391 = vmatpush1.msra.mxu0 0.0
        %1392 = vmatprep.subr.mxu0 0.0
        %1393 = vmatpush1.msra.mxu0 0.0
        %1394 = vmatprep.subr.mxu0 0.0
        %1395 = vmatpush1.msra.mxu0 0.0
        %1396 = vmatprep.subr.mxu0 0.0
        %1397 = vmatpush1.msra.mxu0 0.0
        %1398 = vmatprep.subr.mxu0 0.0
        %1399 = vmatpush1.msra.mxu0 0.0
        %1400 = vmatprep.subr.mxu0 0.0
        %1401 = vmatpush1.msra.mxu0 0.0
        %1402 = vmatprep.subr.mxu0 0.0
        %1403 = vmatpush1.msra.mxu0 0.0
        %1404 = vmatprep.mubr.f32.mxu0 0.0
        %1405 = vmatmul.mubr.f32.gmra.mrb[0].mxu0 %v775
        %v1406 = vpop.f32.mrb[0].mxu0
        %v1407 = vadd.f32 %v1262, %v1406
        %v1408 = vpop.f32.mrb[0].mxu0
        %1409 = vmatprep.mubr.f32.mxu0 0.0
        %1410 = vmatmul.mubr.f32.gmra.mrb[0].mxu0 %v778
        %v1411 = vpop.f32.mrb[0].mxu0
        %v1412 = vadd.f32 %v1267, %v1411
        %v1413 = vpop.f32.mrb[0].mxu0
        %1414 = vmatprep.mubr.f32.mxu0 0.0
        %1415 = vmatmul.mubr.f32.gmra.mrb[0].mxu0 %v781
        %v1416 = vpop.f32.mrb[0].mxu0
        %v1417 = vadd.f32 %v1272, %v1416
        %v1418 = vpop.f32.mrb[0].mxu0
        %1419 = vmatprep.mubr.f32.mxu0 0.0
        %1420 = vmatmul.mubr.f32.gmra.mrb[0].mxu0 %v784
        %v1421 = vpop.f32.mrb[0].mxu0
        %v1422 = vadd.f32 %v1277, %v1421
        %v1423 = vpop.f32.mrb[0].mxu0
        %1424 = vmatprep.mubr.f32.mxu0 0.0
        %1425 = vmatmul.mubr.f32.gmra.mrb[0].mxu0 %v787
        %v1426 = vpop.f32.mrb[0].mxu0
        %v1427 = vadd.f32 %v1282, %v1426
        %v1428 = vpop.f32.mrb[0].mxu0
        %1429 = vmatprep.mubr.f32.mxu0 0.0
        %1430 = vmatmul.mubr.f32.gmra.mrb[0].mxu0 %v790
        %v1431 = vpop.f32.mrb[0].mxu0
        %v1432 = vadd.f32 %v1287, %v1431
        %v1433 = vpop.f32.mrb[0].mxu0
        %1434 = vmatprep.mubr.f32.mxu0 0.0
        %1435 = vmatmul.mubr.f32.gmra.mrb[0].mxu0 %v793
        %v1436 = vpop.f32.mrb[0].mxu0
        %v1437 = vadd.f32 %v1292, %v1436
        %v1438 = vpop.f32.mrb[0].mxu0
        %1439 = vmatprep.mubr.f32.mxu0 0.0
        %1440 = vmatmul.mubr.f32.gmra.mrb[0].mxu0 %v796
        %v1441 = vpop.f32.mrb[0].mxu0
        %v1442 = vadd.f32 %v1297, %v1441
        %v1443 = vpop.f32.mrb[0].mxu0
        %1444 = vmatprep.mubr.f32.mxu0 0.0
        %1445 = vmatmul.mubr.f32.gmra.mrb[0].mxu0 %v799
        %v1446 = vpop.f32.mrb[0].mxu0
        %v1447 = vadd.f32 %v1302, %v1446
        %v1448 = vpop.f32.mrb[0].mxu0
        %1449 = vmatprep.mubr.f32.mxu0 0.0
        %1450 = vmatmul.mubr.f32.gmra.mrb[0].mxu0 %v802
        %v1451 = vpop.f32.mrb[0].mxu0
        %v1452 = vadd.f32 %v1307, %v1451
        %v1453 = vpop.f32.mrb[0].mxu0
        %1454 = vmatprep.mubr.f32.mxu0 0.0
        %1455 = vmatmul.mubr.f32.gmra.mrb[0].mxu0 %v805
        %v1456 = vpop.f32.mrb[0].mxu0
        %v1457 = vadd.f32 %v1312, %v1456
        %v1458 = vpop.f32.mrb[0].mxu0
        %1459 = vmatprep.mubr.f32.mxu0 0.0
        %1460 = vmatmul.mubr.f32.gmra.mrb[0].mxu0 %v808
        %v1461 = vpop.f32.mrb[0].mxu0
        %v1462 = vadd.f32 %v1317, %v1461
        %v1463 = vpop.f32.mrb[0].mxu0
        %1464 = vmatprep.mubr.f32.mxu0 0.0
        %1465 = vmatmul.mubr.f32.gmra.mrb[0].mxu0 %v811
        %v1466 = vpop.f32.mrb[0].mxu0
        %v1467 = vadd.f32 %v1322, %v1466
        %v1468 = vpop.f32.mrb[0].mxu0
        %1469 = vmatprep.mubr.f32.mxu0 0.0
        %1470 = vmatmul.mubr.f32.gmra.mrb[0].mxu0 %v814
        %v1471 = vpop.f32.mrb[0].mxu0
        %v1472 = vadd.f32 %v1327, %v1471
        %v1473 = vpop.f32.mrb[0].mxu0
        %1474 = vmatprep.mubr.f32.mxu0 0.0
        %1475 = vmatmul.mubr.f32.gmra.mrb[0].mxu0 %v817
        %v1476 = vpop.f32.mrb[0].mxu0
        %v1477 = vadd.f32 %v1332, %v1476
        %v1478 = vpop.f32.mrb[0].mxu0
        %1479 = vmatprep.mubr.f32.mxu0 0.0
        %1480 = vmatmul.mubr.f32.gmra.mrb[0].mxu0 %v820
        %v1481 = vpop.f32.mrb[0].mxu0
        %v1482 = vadd.f32 %v1337, %v1481
        %v1483 = vpop.f32.mrb[0].mxu0
        %1484 = vdwg.mxu0
        %v1485 = vadd.f32 %v1407, %v970
        %v1486 = vadd.f32 %v1412, %v975
        %v1487 = vadd.f32 %v1417, %v980
        %v1488 = vadd.f32 %v1422, %v985
        %v1489 = vadd.f32 %v1427, %v990
        %v1490 = vadd.f32 %v1432, %v995
        %v1491 = vadd.f32 %v1437, %v1000
        %v1492 = vadd.f32 %v1442, %v1005
        %v1493 = vadd.f32 %v1447, %v1010
        %v1494 = vadd.f32 %v1452, %v1015
        %v1495 = vadd.f32 %v1457, %v1020
        %v1496 = vadd.f32 %v1462, %v1025
        %v1497 = vadd.f32 %v1467, %v1030
        %v1498 = vadd.f32 %v1472, %v1035
        %v1499 = vadd.f32 %v1477, %v1040
        %v1500 = vadd.f32 %v1482, %v1045
        %v1501 = vxor.u32 %v1485, 2147483648
        %v1502 = vxor.u32 %v1486, 2147483648
        %v1503 = vxor.u32 %v1487, 2147483648
        %v1504 = vxor.u32 %v1488, 2147483648
        %v1505 = vxor.u32 %v1489, 2147483648
        %v1506 = vxor.u32 %v1490, 2147483648
        %v1507 = vxor.u32 %v1491, 2147483648
        %v1508 = vxor.u32 %v1492, 2147483648
        %v1509 = vxor.u32 %v1493, 2147483648
        %v1510 = vxor.u32 %v1494, 2147483648
        %v1511 = vxor.u32 %v1495, 2147483648
        %v1512 = vxor.u32 %v1496, 2147483648
        %v1513 = vmul.f32 %v1501, 1.442695
        %v1514 = vpow.pop %v1513
        %v1515 = vmul.f32 %v1502, 1.442695
        %v1516 = vpow.pop %v1515
        %v1517 = vmul.f32 %v1503, 1.442695
        %v1518 = vpow.pop %v1517
        %v1519 = vmul.f32 %v1504, 1.442695
        %v1520 = vpow.pop %v1519
        %v1521 = vmul.f32 %v1505, 1.442695
        %v1522 = vpow.pop %v1521
        %v1523 = vmul.f32 %v1506, 1.442695
        %v1524 = vpow.pop %v1523
        %v1525 = vmul.f32 %v1507, 1.442695
        %v1526 = vpow.pop %v1525
        %v1527 = vmul.f32 %v1508, 1.442695
        %v1528 = vpow.pop %v1527
        %v1529 = vmul.f32 %v1509, 1.442695
        %v1530 = vpow.pop %v1529
        %v1531 = vmul.f32 %v1510, 1.442695
        %v1532 = vpow.pop %v1531
        %v1533 = vmul.f32 %v1511, 1.442695
        %v1534 = vpow.pop %v1533
        %v1535 = vmul.f32 %v1512, 1.442695
        %v1536 = vpow.pop %v1535
        %v1537 = vadd.f32 %v1514, 1.0
        %v1538 = vadd.f32 %v1516, 1.0
        %v1539 = vadd.f32 %v1518, 1.0
        %v1540 = vadd.f32 %v1520, 1.0
        %v1541 = vadd.f32 %v1522, 1.0
        %v1542 = vadd.f32 %v1524, 1.0
        %v1543 = vadd.f32 %v1526, 1.0
        %v1544 = vadd.f32 %v1528, 1.0
        %v1545 = vadd.f32 %v1530, 1.0
        %v1546 = vadd.f32 %v1532, 1.0
        %v1547 = vadd.f32 %v1534, 1.0
        %v1548 = vadd.f32 %v1536, 1.0
        %v1549 = vrcp.pop %v1537
        %v1550 = vmul.f32 1.0, %v1549
        %v1551 = vrcp.pop %v1538
        %v1552 = vmul.f32 1.0, %v1551
        %v1553 = vrcp.pop %v1539
        %v1554 = vmul.f32 1.0, %v1553
        %v1555 = vrcp.pop %v1540
        %v1556 = vmul.f32 1.0, %v1555
        %v1557 = vrcp.pop %v1541
        %v1558 = vmul.f32 1.0, %v1557
        %v1559 = vrcp.pop %v1542
        %v1560 = vmul.f32 1.0, %v1559
        %v1561 = vrcp.pop %v1543
        %v1562 = vmul.f32 1.0, %v1561
        %v1563 = vrcp.pop %v1544
        %v1564 = vmul.f32 1.0, %v1563
        %v1565 = vrcp.pop %v1545
        %v1566 = vmul.f32 1.0, %v1565
        %v1567 = vrcp.pop %v1546
        %v1568 = vmul.f32 1.0, %v1567
        %v1569 = vrcp.pop %v1547
        %v1570 = vmul.f32 1.0, %v1569
        %v1571 = vrcp.pop %v1548
        %v1572 = vmul.f32 1.0, %v1571
        %v1573 = vtanh.pop %v1497
        %v1574 = vtanh.pop %v1498
        %v1575 = vtanh.pop %v1499
        %v1576 = vtanh.pop %v1500
        %v1577 = vmul.f32 %v1550, %v1573
        %v1578 = vmul.f32 %v1552, %v1574
        %v1579 = vmul.f32 %v1554, %v1575
        %v1580 = vmul.f32 %v1556, %v1576
        %v1581 = vmul.f32 %v1558, %v1171
        %v1582 = vmul.f32 %v1560, %v1172
        %v1583 = vmul.f32 %v1562, %v1173
        %v1584 = vmul.f32 %v1564, %v1174
        %v1585 = vadd.f32 %v1577, %v1581
        %v1586 = vadd.f32 %v1578, %v1582
        %v1587 = vadd.f32 %v1579, %v1583
        %v1588 = vadd.f32 %v1580, %v1584
        %1593 = vrot.lane.b32.xlu0 %v1171, 112
        %v1594 = vpop.permute.xlu0 %1593
        %1595 = vrot.lane.b32.xlu0 %v1172, 112
        %v1596 = vpop.permute.xlu0 %1595
        %1597 = vrot.lane.b32.xlu0 %v1173, 112
        %v1598 = vpop.permute.xlu0 %1597
        %1599 = vrot.lane.b32.xlu0 %v1174, 112
        %v1600 = vpop.permute.xlu0 %1599
        %v1605 = vmul.f32 %v1566, %v1594
        %v1606 = vmul.f32 %v1568, %v1596
        %v1607 = vmul.f32 %v1570, %v1598
        %v1608 = vmul.f32 %v1572, %v1600
        %v1609 = vadd.f32 %v1585, %v1605
        %v1610 = vadd.f32 %v1586, %v1606
        %v1611 = vadd.f32 %v1587, %v1607
        %v1612 = vadd.f32 %v1588, %v1608
        %v1613 = vtanh.pop %v1609
        %v1614 = vtanh.pop %v1610
        %v1615 = vtanh.pop %v1611
        %v1616 = vtanh.pop %v1612
        %1621 = vrot.lane.b32.xlu0 %v1613, 120
        %v1622 = vpop.permute.xlu0 %1621
        %1623 = vrot.lane.b32.xlu0 %v1614, 120
        %v1624 = vpop.permute.xlu0 %1623
        %1625 = vrot.lane.b32.xlu0 %v1615, 120
        %v1626 = vpop.permute.xlu0 %1625
        %1627 = vrot.lane.b32.xlu0 %v1616, 120
        %v1628 = vpop.permute.xlu0 %1627
        %1633 = vmatprep.subr.mxu0 0.0
        %1634 = vmatpush1.msra.mxu0 %v1622
        %1635 = vmatprep.subr.mxu0 0.0
        %1636 = vmatpush1.msra.mxu0 %v1624
        %1637 = vmatprep.subr.mxu0 0.0
        %1638 = vmatpush1.msra.mxu0 %v1626
        %1639 = vmatprep.subr.mxu0 0.0
        %1640 = vmatpush1.msra.mxu0 %v1628
        %1641 = vmatprep.subr.mxu0 0.0
        %1642 = vmatpush1.msra.mxu0 0.0
        %1643 = vmatprep.subr.mxu0 0.0
        %1644 = vmatpush1.msra.mxu0 0.0
        %1645 = vmatprep.subr.mxu0 0.0
        %1646 = vmatpush1.msra.mxu0 0.0
        %1647 = vmatprep.subr.mxu0 0.0
        %1648 = vmatpush1.msra.mxu0 0.0
        %1649 = vmatprep.subr.mxu0 0.0
        %1650 = vmatpush1.msra.mxu0 0.0
        %1651 = vmatprep.subr.mxu0 0.0
        %1652 = vmatpush1.msra.mxu0 0.0
        %1653 = vmatprep.subr.mxu0 0.0
        %1654 = vmatpush1.msra.mxu0 0.0
        %1655 = vmatprep.subr.mxu0 0.0
        %1656 = vmatpush1.msra.mxu0 0.0
        %1657 = vmatprep.subr.mxu0 0.0
        %1658 = vmatpush1.msra.mxu0 0.0
        %1659 = vmatprep.subr.mxu0 0.0
        %1660 = vmatpush1.msra.mxu0 0.0
        %1661 = vmatprep.subr.mxu0 0.0
        %1662 = vmatpush1.msra.mxu0 0.0
        %1663 = vmatprep.subr.mxu0 0.0
        %1664 = vmatpush1.msra.mxu0 0.0
        %1665 = vmatprep.subr.mxu0 0.0
        %1666 = vmatpush1.msra.mxu0 0.0
        %1667 = vmatprep.subr.mxu0 0.0
        %1668 = vmatpush1.msra.mxu0 0.0
        %1669 = vmatprep.subr.mxu0 0.0
        %1670 = vmatpush1.msra.mxu0 0.0
        %1671 = vmatprep.subr.mxu0 0.0
        %1672 = vmatpush1.msra.mxu0 0.0
        %1673 = vmatprep.subr.mxu0 0.0
        %1674 = vmatpush1.msra.mxu0 0.0
        %1675 = vmatprep.subr.mxu0 0.0
        %1676 = vmatpush1.msra.mxu0 0.0
        %1677 = vmatprep.subr.mxu0 0.0
        %1678 = vmatpush1.msra.mxu0 0.0
        %1679 = vmatprep.subr.mxu0 0.0
        %1680 = vmatpush1.msra.mxu0 0.0
        %1681 = vmatprep.subr.mxu0 0.0
        %1682 = vmatpush1.msra.mxu0 0.0
        %1683 = vmatprep.subr.mxu0 0.0
        %1684 = vmatpush1.msra.mxu0 0.0
        %1685 = vmatprep.subr.mxu0 0.0
        %1686 = vmatpush1.msra.mxu0 0.0
        %1687 = vmatprep.subr.mxu0 0.0
        %1688 = vmatpush1.msra.mxu0 0.0
        %1689 = vmatprep.subr.mxu0 0.0
        %1690 = vmatpush1.msra.mxu0 0.0
        %1691 = vmatprep.subr.mxu0 0.0
        %1692 = vmatpush1.msra.mxu0 0.0
        %1693 = vmatprep.subr.mxu0 0.0
        %1694 = vmatpush1.msra.mxu0 0.0
        %1695 = vmatprep.subr.mxu0 0.0
        %1696 = vmatpush1.msra.mxu0 0.0
        %1697 = vmatprep.mubr.f32.mxu0 0.0
        %1698 = vmatmul.mubr.f32.gmra.mrb[0].mxu0 %v582
        %v1699 = vpop.f32.mrb[0].mxu0
        %v1700 = vadd.f32 0.0, %v1699
        %v1701 = vpop.f32.mrb[0].mxu0
        %1702 = vmatprep.mubr.f32.mxu0 0.0
        %1703 = vmatmul.mubr.f32.gmra.mrb[0].mxu0 %v585
        %v1704 = vpop.f32.mrb[0].mxu0
        %v1705 = vadd.f32 0.0, %v1704
        %v1706 = vpop.f32.mrb[0].mxu0
        %1707 = vmatprep.mubr.f32.mxu0 0.0
        %1708 = vmatmul.mubr.f32.gmra.mrb[0].mxu0 %v588
        %v1709 = vpop.f32.mrb[0].mxu0
        %v1710 = vadd.f32 0.0, %v1709
        %v1711 = vpop.f32.mrb[0].mxu0
        %1712 = vmatprep.mubr.f32.mxu0 0.0
        %1713 = vmatmul.mubr.f32.gmra.mrb[0].mxu0 %v591
        %v1714 = vpop.f32.mrb[0].mxu0
        %v1715 = vadd.f32 0.0, %v1714
        %v1716 = vpop.f32.mrb[0].mxu0
        %1717 = vmatprep.mubr.f32.mxu0 0.0
        %1718 = vmatmul.mubr.f32.gmra.mrb[0].mxu0 %v594
        %v1719 = vpop.f32.mrb[0].mxu0
        %v1720 = vadd.f32 0.0, %v1719
        %v1721 = vpop.f32.mrb[0].mxu0
        %1722 = vmatprep.mubr.f32.mxu0 0.0
        %1723 = vmatmul.mubr.f32.gmra.mrb[0].mxu0 %v597
        %v1724 = vpop.f32.mrb[0].mxu0
        %v1725 = vadd.f32 0.0, %v1724
        %v1726 = vpop.f32.mrb[0].mxu0
        %1727 = vmatprep.mubr.f32.mxu0 0.0
        %1728 = vmatmul.mubr.f32.gmra.mrb[0].mxu0 %v600
        %v1729 = vpop.f32.mrb[0].mxu0
        %v1730 = vadd.f32 0.0, %v1729
        %v1731 = vpop.f32.mrb[0].mxu0
        %1732 = vmatprep.mubr.f32.mxu0 0.0
        %1733 = vmatmul.mubr.f32.gmra.mrb[0].mxu0 %v603
        %v1734 = vpop.f32.mrb[0].mxu0
        %v1735 = vadd.f32 0.0, %v1734
        %v1736 = vpop.f32.mrb[0].mxu0
        %1737 = vmatprep.mubr.f32.mxu0 0.0
        %1738 = vmatmul.mubr.f32.gmra.mrb[0].mxu0 %v606
        %v1739 = vpop.f32.mrb[0].mxu0
        %v1740 = vadd.f32 0.0, %v1739
        %v1741 = vpop.f32.mrb[0].mxu0
        %1742 = vmatprep.mubr.f32.mxu0 0.0
        %1743 = vmatmul.mubr.f32.gmra.mrb[0].mxu0 %v609
        %v1744 = vpop.f32.mrb[0].mxu0
        %v1745 = vadd.f32 0.0, %v1744
        %v1746 = vpop.f32.mrb[0].mxu0
        %1747 = vmatprep.mubr.f32.mxu0 0.0
        %1748 = vmatmul.mubr.f32.gmra.mrb[0].mxu0 %v612
        %v1749 = vpop.f32.mrb[0].mxu0
        %v1750 = vadd.f32 0.0, %v1749
        %v1751 = vpop.f32.mrb[0].mxu0
        %1752 = vmatprep.mubr.f32.mxu0 0.0
        %1753 = vmatmul.mubr.f32.gmra.mrb[0].mxu0 %v615
        %v1754 = vpop.f32.mrb[0].mxu0
        %v1755 = vadd.f32 0.0, %v1754
        %v1756 = vpop.f32.mrb[0].mxu0
        %1757 = vmatprep.mubr.f32.mxu0 0.0
        %1758 = vmatmul.mubr.f32.gmra.mrb[0].mxu0 %v618
        %v1759 = vpop.f32.mrb[0].mxu0
        %v1760 = vadd.f32 0.0, %v1759
        %v1761 = vpop.f32.mrb[0].mxu0
        %1762 = vmatprep.mubr.f32.mxu0 0.0
        %1763 = vmatmul.mubr.f32.gmra.mrb[0].mxu0 %v621
        %v1764 = vpop.f32.mrb[0].mxu0
        %v1765 = vadd.f32 0.0, %v1764
        %v1766 = vpop.f32.mrb[0].mxu0
        %1767 = vmatprep.mubr.f32.mxu0 0.0
        %1768 = vmatmul.mubr.f32.gmra.mrb[0].mxu0 %v624
        %v1769 = vpop.f32.mrb[0].mxu0
        %v1770 = vadd.f32 0.0, %v1769
        %v1771 = vpop.f32.mrb[0].mxu0
        %1772 = vmatprep.mubr.f32.mxu0 0.0
        %1773 = vmatmul.mubr.f32.gmra.mrb[0].mxu0 %v627
        %v1774 = vpop.f32.mrb[0].mxu0
        %v1775 = vadd.f32 0.0, %v1774
        %v1776 = vpop.f32.mrb[0].mxu0
        %1777 = vdwg.mxu0
        %1778 = vmatprep.subr.mxu0 0.0
        %1779 = vmatpush1.msra.mxu0 %v1613
        %1780 = vmatprep.subr.mxu0 0.0
        %1781 = vmatpush1.msra.mxu0 %v1614
        %1782 = vmatprep.subr.mxu0 0.0
        %1783 = vmatpush1.msra.mxu0 %v1615
        %1784 = vmatprep.subr.mxu0 0.0
        %1785 = vmatpush1.msra.mxu0 %v1616
        %1786 = vmatprep.subr.mxu0 0.0
        %1787 = vmatpush1.msra.mxu0 0.0
        %1788 = vmatprep.subr.mxu0 0.0
        %1789 = vmatpush1.msra.mxu0 0.0
        %1790 = vmatprep.subr.mxu0 0.0
        %1791 = vmatpush1.msra.mxu0 0.0
        %1792 = vmatprep.subr.mxu0 0.0
        %1793 = vmatpush1.msra.mxu0 0.0
        %1794 = vmatprep.subr.mxu0 0.0
        %1795 = vmatpush1.msra.mxu0 0.0
        %1796 = vmatprep.subr.mxu0 0.0
        %1797 = vmatpush1.msra.mxu0 0.0
        %1798 = vmatprep.subr.mxu0 0.0
        %1799 = vmatpush1.msra.mxu0 0.0
        %1800 = vmatprep.subr.mxu0 0.0
        %1801 = vmatpush1.msra.mxu0 0.0
        %1802 = vmatprep.subr.mxu0 0.0
        %1803 = vmatpush1.msra.mxu0 0.0
        %1804 = vmatprep.subr.mxu0 0.0
        %1805 = vmatpush1.msra.mxu0 0.0
        %1806 = vmatprep.subr.mxu0 0.0
        %1807 = vmatpush1.msra.mxu0 0.0
        %1808 = vmatprep.subr.mxu0 0.0
        %1809 = vmatpush1.msra.mxu0 0.0
        %1810 = vmatprep.subr.mxu0 0.0
        %1811 = vmatpush1.msra.mxu0 0.0
        %1812 = vmatprep.subr.mxu0 0.0
        %1813 = vmatpush1.msra.mxu0 0.0
        %1814 = vmatprep.subr.mxu0 0.0
        %1815 = vmatpush1.msra.mxu0 0.0
        %1816 = vmatprep.subr.mxu0 0.0
        %1817 = vmatpush1.msra.mxu0 0.0
        %1818 = vmatprep.subr.mxu0 0.0
        %1819 = vmatpush1.msra.mxu0 0.0
        %1820 = vmatprep.subr.mxu0 0.0
        %1821 = vmatpush1.msra.mxu0 0.0
        %1822 = vmatprep.subr.mxu0 0.0
        %1823 = vmatpush1.msra.mxu0 0.0
        %1824 = vmatprep.subr.mxu0 0.0
        %1825 = vmatpush1.msra.mxu0 0.0
        %1826 = vmatprep.subr.mxu0 0.0
        %1827 = vmatpush1.msra.mxu0 0.0
        %1828 = vmatprep.subr.mxu0 0.0
        %1829 = vmatpush1.msra.mxu0 0.0
        %1830 = vmatprep.subr.mxu0 0.0
        %1831 = vmatpush1.msra.mxu0 0.0
        %1832 = vmatprep.subr.mxu0 0.0
        %1833 = vmatpush1.msra.mxu0 0.0
        %1834 = vmatprep.subr.mxu0 0.0
        %1835 = vmatpush1.msra.mxu0 0.0
        %1836 = vmatprep.subr.mxu0 0.0
        %1837 = vmatpush1.msra.mxu0 0.0
        %1838 = vmatprep.subr.mxu0 0.0
        %1839 = vmatpush1.msra.mxu0 0.0
        %1840 = vmatprep.subr.mxu0 0.0
        %1841 = vmatpush1.msra.mxu0 0.0
        %1842 = vmatprep.mubr.f32.mxu0 0.0
        %1843 = vmatmul.mubr.f32.gmra.mrb[0].mxu0 %v775
        %v1844 = vpop.f32.mrb[0].mxu0
        %v1845 = vadd.f32 %v1700, %v1844
        %v1846 = vpop.f32.mrb[0].mxu0
        %1847 = vmatprep.mubr.f32.mxu0 0.0
        %1848 = vmatmul.mubr.f32.gmra.mrb[0].mxu0 %v778
        %v1849 = vpop.f32.mrb[0].mxu0
        %v1850 = vadd.f32 %v1705, %v1849
        %v1851 = vpop.f32.mrb[0].mxu0
        %1852 = vmatprep.mubr.f32.mxu0 0.0
        %1853 = vmatmul.mubr.f32.gmra.mrb[0].mxu0 %v781
        %v1854 = vpop.f32.mrb[0].mxu0
        %v1855 = vadd.f32 %v1710, %v1854
        %v1856 = vpop.f32.mrb[0].mxu0
        %1857 = vmatprep.mubr.f32.mxu0 0.0
        %1858 = vmatmul.mubr.f32.gmra.mrb[0].mxu0 %v784
        %v1859 = vpop.f32.mrb[0].mxu0
        %v1860 = vadd.f32 %v1715, %v1859
        %v1861 = vpop.f32.mrb[0].mxu0
        %1862 = vmatprep.mubr.f32.mxu0 0.0
        %1863 = vmatmul.mubr.f32.gmra.mrb[0].mxu0 %v787
        %v1864 = vpop.f32.mrb[0].mxu0
        %v1865 = vadd.f32 %v1720, %v1864
        %v1866 = vpop.f32.mrb[0].mxu0
        %1867 = vmatprep.mubr.f32.mxu0 0.0
        %1868 = vmatmul.mubr.f32.gmra.mrb[0].mxu0 %v790
        %v1869 = vpop.f32.mrb[0].mxu0
        %v1870 = vadd.f32 %v1725, %v1869
        %v1871 = vpop.f32.mrb[0].mxu0
        %1872 = vmatprep.mubr.f32.mxu0 0.0
        %1873 = vmatmul.mubr.f32.gmra.mrb[0].mxu0 %v793
        %v1874 = vpop.f32.mrb[0].mxu0
        %v1875 = vadd.f32 %v1730, %v1874
        %v1876 = vpop.f32.mrb[0].mxu0
        %1877 = vmatprep.mubr.f32.mxu0 0.0
        %1878 = vmatmul.mubr.f32.gmra.mrb[0].mxu0 %v796
        %v1879 = vpop.f32.mrb[0].mxu0
        %v1880 = vadd.f32 %v1735, %v1879
        %v1881 = vpop.f32.mrb[0].mxu0
        %1882 = vmatprep.mubr.f32.mxu0 0.0
        %1883 = vmatmul.mubr.f32.gmra.mrb[0].mxu0 %v799
        %v1884 = vpop.f32.mrb[0].mxu0
        %v1885 = vadd.f32 %v1740, %v1884
        %v1886 = vpop.f32.mrb[0].mxu0
        %1887 = vmatprep.mubr.f32.mxu0 0.0
        %1888 = vmatmul.mubr.f32.gmra.mrb[0].mxu0 %v802
        %v1889 = vpop.f32.mrb[0].mxu0
        %v1890 = vadd.f32 %v1745, %v1889
        %v1891 = vpop.f32.mrb[0].mxu0
        %1892 = vmatprep.mubr.f32.mxu0 0.0
        %1893 = vmatmul.mubr.f32.gmra.mrb[0].mxu0 %v805
        %v1894 = vpop.f32.mrb[0].mxu0
        %v1895 = vadd.f32 %v1750, %v1894
        %v1896 = vpop.f32.mrb[0].mxu0
        %1897 = vmatprep.mubr.f32.mxu0 0.0
        %1898 = vmatmul.mubr.f32.gmra.mrb[0].mxu0 %v808
        %v1899 = vpop.f32.mrb[0].mxu0
        %v1900 = vadd.f32 %v1755, %v1899
        %v1901 = vpop.f32.mrb[0].mxu0
        %1902 = vmatprep.mubr.f32.mxu0 0.0
        %1903 = vmatmul.mubr.f32.gmra.mrb[0].mxu0 %v811
        %v1904 = vpop.f32.mrb[0].mxu0
        %v1905 = vadd.f32 %v1760, %v1904
        %v1906 = vpop.f32.mrb[0].mxu0
        %1907 = vmatprep.mubr.f32.mxu0 0.0
        %1908 = vmatmul.mubr.f32.gmra.mrb[0].mxu0 %v814
        %v1909 = vpop.f32.mrb[0].mxu0
        %v1910 = vadd.f32 %v1765, %v1909
        %v1911 = vpop.f32.mrb[0].mxu0
        %1912 = vmatprep.mubr.f32.mxu0 0.0
        %1913 = vmatmul.mubr.f32.gmra.mrb[0].mxu0 %v817
        %v1914 = vpop.f32.mrb[0].mxu0
        %v1915 = vadd.f32 %v1770, %v1914
        %v1916 = vpop.f32.mrb[0].mxu0
        %1917 = vmatprep.mubr.f32.mxu0 0.0
        %1918 = vmatmul.mubr.f32.gmra.mrb[0].mxu0 %v820
        %v1919 = vpop.f32.mrb[0].mxu0
        %v1920 = vadd.f32 %v1775, %v1919
        %v1921 = vpop.f32.mrb[0].mxu0
        %1922 = vdwg.mxu0
        %v1923 = vadd.f32 %v1845, %v970
        %v1924 = vadd.f32 %v1850, %v975
        %v1925 = vadd.f32 %v1855, %v980
        %v1926 = vadd.f32 %v1860, %v985
        %v1927 = vadd.f32 %v1865, %v990
        %v1928 = vadd.f32 %v1870, %v995
        %v1929 = vadd.f32 %v1875, %v1000
        %v1930 = vadd.f32 %v1880, %v1005
        %v1931 = vadd.f32 %v1885, %v1010
        %v1932 = vadd.f32 %v1890, %v1015
        %v1933 = vadd.f32 %v1895, %v1020
        %v1934 = vadd.f32 %v1900, %v1025
        %v1935 = vadd.f32 %v1905, %v1030
        %v1936 = vadd.f32 %v1910, %v1035
        %v1937 = vadd.f32 %v1915, %v1040
        %v1938 = vadd.f32 %v1920, %v1045
        %v1939 = vxor.u32 %v1923, 2147483648
        %v1940 = vxor.u32 %v1924, 2147483648
        %v1941 = vxor.u32 %v1925, 2147483648
        %v1942 = vxor.u32 %v1926, 2147483648
        %v1943 = vxor.u32 %v1927, 2147483648
        %v1944 = vxor.u32 %v1928, 2147483648
        %v1945 = vxor.u32 %v1929, 2147483648
        %v1946 = vxor.u32 %v1930, 2147483648
        %v1947 = vxor.u32 %v1931, 2147483648
        %v1948 = vxor.u32 %v1932, 2147483648
        %v1949 = vxor.u32 %v1933, 2147483648
        %v1950 = vxor.u32 %v1934, 2147483648
        %v1951 = vmul.f32 %v1939, 1.442695
        %v1952 = vpow.pop %v1951
        %v1953 = vmul.f32 %v1940, 1.442695
        %v1954 = vpow.pop %v1953
        %v1955 = vmul.f32 %v1941, 1.442695
        %v1956 = vpow.pop %v1955
        %v1957 = vmul.f32 %v1942, 1.442695
        %v1958 = vpow.pop %v1957
        %v1959 = vmul.f32 %v1943, 1.442695
        %v1960 = vpow.pop %v1959
        %v1961 = vmul.f32 %v1944, 1.442695
        %v1962 = vpow.pop %v1961
        %v1963 = vmul.f32 %v1945, 1.442695
        %v1964 = vpow.pop %v1963
        %v1965 = vmul.f32 %v1946, 1.442695
        %v1966 = vpow.pop %v1965
        %v1967 = vmul.f32 %v1947, 1.442695
        %v1968 = vpow.pop %v1967
        %v1969 = vmul.f32 %v1948, 1.442695
        %v1970 = vpow.pop %v1969
        %v1971 = vmul.f32 %v1949, 1.442695
        %v1972 = vpow.pop %v1971
        %v1973 = vmul.f32 %v1950, 1.442695
        %v1974 = vpow.pop %v1973
        %v1975 = vadd.f32 %v1952, 1.0
        %v1976 = vadd.f32 %v1954, 1.0
        %v1977 = vadd.f32 %v1956, 1.0
        %v1978 = vadd.f32 %v1958, 1.0
        %v1979 = vadd.f32 %v1960, 1.0
        %v1980 = vadd.f32 %v1962, 1.0
        %v1981 = vadd.f32 %v1964, 1.0
        %v1982 = vadd.f32 %v1966, 1.0
        %v1983 = vadd.f32 %v1968, 1.0
        %v1984 = vadd.f32 %v1970, 1.0
        %v1985 = vadd.f32 %v1972, 1.0
        %v1986 = vadd.f32 %v1974, 1.0
        %v1987 = vrcp.pop %v1975
        %v1988 = vmul.f32 1.0, %v1987
        %v1989 = vrcp.pop %v1976
        %v1990 = vmul.f32 1.0, %v1989
        %v1991 = vrcp.pop %v1977
        %v1992 = vmul.f32 1.0, %v1991
        %v1993 = vrcp.pop %v1978
        %v1994 = vmul.f32 1.0, %v1993
        %v1995 = vrcp.pop %v1979
        %v1996 = vmul.f32 1.0, %v1995
        %v1997 = vrcp.pop %v1980
        %v1998 = vmul.f32 1.0, %v1997
        %v1999 = vrcp.pop %v1981
        %v2000 = vmul.f32 1.0, %v1999
        %v2001 = vrcp.pop %v1982
        %v2002 = vmul.f32 1.0, %v2001
        %v2003 = vrcp.pop %v1983
        %v2004 = vmul.f32 1.0, %v2003
        %v2005 = vrcp.pop %v1984
        %v2006 = vmul.f32 1.0, %v2005
        %v2007 = vrcp.pop %v1985
        %v2008 = vmul.f32 1.0, %v2007
        %v2009 = vrcp.pop %v1986
        %v2010 = vmul.f32 1.0, %v2009
        %v2011 = vtanh.pop %v1935
        %v2012 = vtanh.pop %v1936
        %v2013 = vtanh.pop %v1937
        %v2014 = vtanh.pop %v1938
        %v2015 = vmul.f32 %v1988, %v2011
        %v2016 = vmul.f32 %v1990, %v2012
        %v2017 = vmul.f32 %v1992, %v2013
        %v2018 = vmul.f32 %v1994, %v2014
        %v2019 = vmul.f32 %v1996, %v1609
        %v2020 = vmul.f32 %v1998, %v1610
        %v2021 = vmul.f32 %v2000, %v1611
        %v2022 = vmul.f32 %v2002, %v1612
        %v2023 = vadd.f32 %v2015, %v2019
        %v2024 = vadd.f32 %v2016, %v2020
        %v2025 = vadd.f32 %v2017, %v2021
        %v2026 = vadd.f32 %v2018, %v2022
        %2031 = vrot.lane.b32.xlu0 %v1609, 120
        %v2032 = vpop.permute.xlu0 %2031
        %2033 = vrot.lane.b32.xlu0 %v1610, 120
        %v2034 = vpop.permute.xlu0 %2033
        %2035 = vrot.lane.b32.xlu0 %v1611, 120
        %v2036 = vpop.permute.xlu0 %2035
        %2037 = vrot.lane.b32.xlu0 %v1612, 120
        %v2038 = vpop.permute.xlu0 %2037
        %v2043 = vmul.f32 %v2004, %v2032
        %v2044 = vmul.f32 %v2006, %v2034
        %v2045 = vmul.f32 %v2008, %v2036
        %v2046 = vmul.f32 %v2010, %v2038
        %v2047 = vadd.f32 %v2023, %v2043
        %v2048 = vadd.f32 %v2024, %v2044
        %v2049 = vadd.f32 %v2025, %v2045
        %v2050 = vadd.f32 %v2026, %v2046
        %v2051 = vtanh.pop %v2047
        %v2052 = vtanh.pop %v2048
        %v2053 = vtanh.pop %v2049
        %v2054 = vtanh.pop %v2050
        %vm2055 = vcmask 64512
        %2056 = vst.msk [vmem:[%s289] sm:$0xff] %vm2055, %v2047
        %2057 = vst.msk [vmem:[%s289 + $0x8] sm:$0xff] %vm2055, %v2048
        %2058 = vst.msk [vmem:[%s289 + $0x10] sm:$0xff] %vm2055, %v2049
        %2059 = vst.msk [vmem:[%s289 + $0x18] sm:$0xff] %vm2055, %v2050
        %2060 = vst.msk [vmem:[%s289 + $0x20] sm:$0xff] %vm2055, %v2051
        %2061 = vst.msk [vmem:[%s289 + $0x28] sm:$0xff] %vm2055, %v2052
        %2062 = vst.msk [vmem:[%s289 + $0x30] sm:$0xff] %vm2055, %v2053
        %2063 = vst.msk [vmem:[%s289 + $0x38] sm:$0xff] %vm2055, %v2054
        %s2064 = sand.u32 %s161, 1
        %s2065 = scalar_lea.sflag [#allocation3], %s2064
        %s2066 = sand.u32 %s161, 1
        %s2067 = smul.addr %s2066, 32
        %s2068 = scalar_lea.vmem [#allocation2], %s2067
        %p2069 = scmp.lt.s32.totalorder %s22, 1
        %s2070 = scalar_select %p2069, %s22, 1
        %s2071 = smul.addr %s2070, 8
        %s2072 = smul.addr %s2071, 8
        %s2073 = scalar_lea.vmem %s7, %s2072
        // Predicated region
        $region45: #{tpu_custom_call.1} parent=43 // pred_check
          %p2074 = pneg %p171
        $region46: #{tpu_custom_call.1} parent=43 // pred_check_branch
          %2076 = sbr.rel (%p2074) target = $region48
        $region47: #{tpu_custom_call.1} parent=43 // pred_region
          %s2078 = ssub.s32 512, 512
          %2079 = vsyncadd %s2065, %s2078
          %s2080 = smul.addr %s22, 4
          %s2081 = smul.addr %s2080, 128
          %s2082 = scalar_lea.hbm %s6, %s2081
          %s2083 = sshll.u32 %s2068, 4
          %s2084 = int_to_ptr.vmem [resolvable:$true] %s2083
          %2089 = dma.vmem_to_hbm [thread:$0]  %s2084, 512, %s2082, %s2065, 128, 128, 8
        $region48: #{tpu_custom_call.1} parent=43 // pred_fallthru
          _
        // Predicated region
        $region49: #{tpu_custom_call.1} parent=43 // pred_check
          %p2090 = pneg %p197
        $region50: #{tpu_custom_call.1} parent=43 // pred_check_branch
          %2092 = sbr.rel (%p2090) target = $region52
        $region51: #{tpu_custom_call.1} parent=43 // pred_region
          _
        $region52: #{tpu_custom_call.1} parent=43 // pred_fallthru
          _
      $region44: #{tpu_custom_call.1} parent=5 // pred_fallthru
        _
      %p2093 = scmp.le.s32.totalorder 2, %s17
      // Predicated region
      $region53: #{tpu_custom_call.1} parent=5 // pred_check
        %p2094 = pneg %p2093
      $region54: #{tpu_custom_call.1} parent=5 // pred_check_branch
        %2096 = sbr.rel (%p2094) target = $region56
      $region55: #{tpu_custom_call.1} parent=5 // pred_region
        %s2097 = ssub.s32 %s17, 2
        // Predicated region
        $region57: #{tpu_custom_call.1} parent=55 // pred_check
          %p2098 = pneg %p177
        $region58: #{tpu_custom_call.1} parent=55 // pred_check_branch
          %2100 = sbr.rel (%p2098) target = $region60
        $region59: #{tpu_custom_call.1} parent=55 // pred_region
          %s2101 = sand.u32 %s162, 1
          %s2102 = scalar_lea.sflag [#allocation3], %s2101
          %s2103 = sand.u32 %s162, 1
          %s2104 = smul.addr %s2103, 32
          %s2105 = scalar_lea.vmem [#allocation2], %s2104
          %2106 = dma.done %s2102, 512
        $region60: #{tpu_custom_call.1} parent=55 // pred_fallthru
          _
        // Predicated region
        $region61: #{tpu_custom_call.1} parent=55 // pred_check
          %p2107 = pneg %p203
        $region62: #{tpu_custom_call.1} parent=55 // pred_check_branch
          %2109 = sbr.rel (%p2107) target = $region64
        $region63: #{tpu_custom_call.1} parent=55 // pred_region
          %p2110 = scmp.lt.s32.totalorder %s23, 1
          %s2111 = scalar_select %p2110, %s23, 1
          %s2112 = smul.addr %s2111, 8
          %s2113 = smul.addr %s2112, 8
          %s2114 = scalar_lea.vmem %s7, %s2113
        $region64: #{tpu_custom_call.1} parent=55 // pred_fallthru
          _
      $region56: #{tpu_custom_call.1} parent=5 // pred_fallthru
        _
    $region6: #{tpu_custom_call.1} parent=1 // loop_footer
      %s21 = sadd.s32 1, %s17
    $region7: #{tpu_custom_call.1} parent=1 // loop_footer_branch
      %16 = sbr.rel target = $region3
    $region8: #{tpu_custom_call.1} parent=1 // loop_exit
      _
    %2115 = vsyncpa [#allocation3], 1
    %s2116 = scalar_lea.sflag [#allocation3], 1
    %2117 = vsyncpa %s2116, 1

</llo_original>
